<compile_context>
chip_gen: v6e
topology: v6e:2x2x1
jax: 0.10.0
libtpu: 0.0.40
codegen_flags: <defaults>
</compile_context>

<pallas_src>
import jax
import jax.numpy as jnp
from jax.experimental import pallas as pl
from jax.experimental.pallas import tpu as pltpu

# ------------------------- problem sizes (small, synthetic) -------------------
BATCH = 4
IN_FEATURES = 64                     # img_features dim
H1, H2 = 128, 128                    # fc_layers_neurons
NUM_PARAMS = 3 + 24 * 6 + 10         # 157: cam(3) + 6d pose(144) + shape(10)
ITERATIONS = 3

F_PAD = 128                          # IN_FEATURES padded lane-dense
P_PAD = 256                          # NUM_PARAMS padded to a multiple of 128
MAX_BM = 128                         # batch rows per grid step (MXU M target)


def _round_up(x, m):
    return ((x + m - 1) // m) * m


def _choose_tiling(batch):
    """Pick (BM, B_pad): BM=128 for real batches, clamped (to a sublane multiple)
    for tiny ones; B_pad is always an exact multiple of BM."""
    if batch <= MAX_BM:
        bm = _round_up(batch, 8)
        return bm, bm
    return MAX_BM, _round_up(batch, MAX_BM)


# ------------------------------ Pallas kernel --------------------------------
def ief_kernel(img_ref, init_ref, w1a_ref, w1b_ref, b1_ref, b1f_ref,
               w2_ref, b2_ref, w3_ref, b3_ref, out_ref,
               acc_ref, imgc_ref):
    # Loop-invariant img contribution to fc1 (no bias), hoisted once into VMEM
    # scratch so it is not held in vregs across the unrolled loop.
    imgc_ref[...] = jnp.dot(img_ref[...].astype(jnp.bfloat16), w1a_ref[...],
                            preferred_element_type=jnp.float32)

    # ---- iteration 1 (peeled): params == init for every row, so its W1b
    # contribution is pre-folded into b1f = b1 + init @ W1b at prep time.
    h1 = jnp.maximum(imgc_ref[...] + b1f_ref[...], 0.0)
    h2 = jnp.dot(h1.astype(jnp.bfloat16), w2_ref[...],
                 preferred_element_type=jnp.float32) + b2_ref[...]
    h2 = jnp.maximum(h2, 0.0)
    delta = jnp.dot(h2.astype(jnp.bfloat16), w3_ref[...],
                    preferred_element_type=jnp.float32) + b3_ref[...]
    acc_ref[...] = jnp.broadcast_to(init_ref[...], out_ref.shape) + delta

    # ---- iterations 2..N (statically unrolled).  Weight/bias refs are read at
    # their use sites; the running params estimate lives in VMEM scratch.
    for _ in range(ITERATIONS - 1):
        h1 = imgc_ref[...] + b1_ref[...] + jnp.dot(
            acc_ref[...].astype(jnp.bfloat16), w1b_ref[...],
            preferred_element_type=jnp.float32)
        h1 = jnp.maximum(h1, 0.0)
        h2 = jnp.dot(h1.astype(jnp.bfloat16), w2_ref[...],
                     preferred_element_type=jnp.float32) + b2_ref[...]
        h2 = jnp.maximum(h2, 0.0)
        delta = jnp.dot(h2.astype(jnp.bfloat16), w3_ref[...],
                        preferred_element_type=jnp.float32) + b3_ref[...]
        acc_ref[...] = acc_ref[...] + delta

    out_ref[...] = acc_ref[...]


# ------------------------- one-time weight preparation ------------------------
def prepare_ief_weights(init_params, w1, b1, w2, b2, w3, b3):
    """Split/pad/cast weights once, off the per-call path.

    Zero rows/cols guarantee that padded params lanes (157..255) and padded img
    features (64..127) contribute nothing and stay exactly zero.
    """
    F = IN_FEATURES
    P = init_params.shape[0]

    w1a = w1[:F, :]                                                   # (F, H1)
    w1b = w1[F:, :]                                                   # (P, H1)

    w1a_p = jnp.zeros((F_PAD, H1), jnp.float32).at[:F, :].set(w1a)
    w1b_p = jnp.zeros((P_PAD, H1), jnp.float32).at[:P, :].set(w1b)
    w3_p = jnp.zeros((H2, P_PAD), jnp.float32).at[:, :P].set(w3)
    b3_p = jnp.zeros((P_PAD,), jnp.float32).at[:P].set(b3)
    init_p = jnp.zeros((P_PAD,), jnp.float32).at[:P].set(init_params)

    # Peeled first iteration: fold init @ W1b into an effective bias (f32).
    b1_first = b1 + init_p @ w1b_p                                    # (H1,)

    return dict(
        init=init_p.reshape(1, P_PAD),
        w1a=w1a_p.astype(jnp.bfloat16),
        w1b=w1b_p.astype(jnp.bfloat16),
        b1=b1.reshape(1, H1).astype(jnp.float32),
        b1_first=b1_first.reshape(1, H1).astype(jnp.float32),
        w2=w2.astype(jnp.bfloat16),
        b2=b2.reshape(1, H2).astype(jnp.float32),
        w3=w3_p.astype(jnp.bfloat16),
        b3=b3_p.reshape(1, P_PAD),
    )


# ------------------------------ forward wrapper --------------------------------
def ief_forward(img_features, wts, num_params=NUM_PARAMS):
    """Runs the full IEF loop inside one Pallas call.

    img_features: (B, F) float32.  Returns (cam, pose, shape) slices of the
    final params estimate, matching the PyTorch module.
    """
    B, F = img_features.shape
    BM, B_pad = _choose_tiling(B)

    # Single pad op on the hot path: batch rows + feature lanes together.
    img_p = img_features
    if B_pad != B or F_PAD != F:
        img_p = jnp.pad(img_features, ((0, B_pad - B), (0, F_PAD - F)))

    flops = (2 * B_pad * F_PAD * H1
             + ITERATIONS * 2 * B_pad * (H1 * H2 + H2 * P_PAD)
             + (ITERATIONS - 1) * 2 * B_pad * P_PAD * H1)
    bytes_accessed = int(sum(int(a.size) * a.dtype.itemsize
                             for a in (img_p, *wts.values()))
                         + B_pad * P_PAD * 4)

    out = pl.pallas_call(
        ief_kernel,
        out_shape=jax.ShapeDtypeStruct((B_pad, P_PAD), jnp.float32),
        grid=(B_pad // BM,),
        in_specs=[
            pl.BlockSpec((BM, F_PAD), lambda i: (i, 0)),      # img (blocked over batch)
            pl.BlockSpec((1, P_PAD), lambda i: (0, 0)),       # init params row
            pl.BlockSpec((F_PAD, H1), lambda i: (0, 0)),      # w1a (img rows of fc1)
            pl.BlockSpec((P_PAD, H1), lambda i: (0, 0)),      # w1b (params rows of fc1)
            pl.BlockSpec((1, H1), lambda i: (0, 0)),          # b1
            pl.BlockSpec((1, H1), lambda i: (0, 0)),          # b1_first (peeled iter 1)
            pl.BlockSpec((H1, H2), lambda i: (0, 0)),         # w2
            pl.BlockSpec((1, H2), lambda i: (0, 0)),          # b2
            pl.BlockSpec((H2, P_PAD), lambda i: (0, 0)),      # w3
            pl.BlockSpec((1, P_PAD), lambda i: (0, 0)),       # b3
        ],
        out_specs=pl.BlockSpec((BM, P_PAD), lambda i: (i, 0)),
        scratch_shapes=[
            pltpu.VMEM((BM, P_PAD), jnp.float32),             # params accumulator
            pltpu.VMEM((BM, H1), jnp.float32),                # hoisted img @ W1a
        ],
        compiler_params=pltpu.CompilerParams(
            dimension_semantics=("parallel",)),               # batch axis -> both v7x TCs
        cost_estimate=pl.CostEstimate(flops=flops, transcendentals=0,
                                      bytes_accessed=bytes_accessed),
    )(img_p, wts["init"], wts["w1a"], wts["w1b"], wts["b1"], wts["b1_first"],
      wts["w2"], wts["b2"], wts["w3"], wts["b3"])

    params = out[:B, :num_params]
    cam_params = params[:, :3]
    pose_params = params[:, 3:3 + 24 * 6]
    shape_params = params[:, 3 + 24 * 6:]
    return cam_params, pose_params, shape_params


# ------------------------------ reference (plain JAX, f32) ---------------------
def ief_reference(img_features, init_params, w1, b1, w2, b2, w3, b3):
    B = img_features.shape[0]
    params = jnp.broadcast_to(init_params[None, :], (B, init_params.shape[0]))
    for _ in range(ITERATIONS):
        state = jnp.concatenate([img_features, params], axis=1)
        h1 = jnp.maximum(state @ w1 + b1, 0.0)
        h2 = jnp.maximum(h1 @ w2 + b2, 0.0)
        params = params + (h2 @ w3 + b3)
    return params[:, :3], params[:, 3:3 + 24 * 6], params[:, 3 + 24 * 6:]


# ----------------------------------- main --------------------------------------
if __name__ == "__main__":
    key = jax.random.PRNGKey(0)
    k_img, k_pose, k_shape, k_w1, k_w2, k_w3 = jax.random.split(key, 6)

    img_features = jax.random.normal(k_img, (BATCH, IN_FEATURES), jnp.float32)

    # Deterministic synthetic "mean SMPL params" (stand-in for the .npz file).
    # TODO(synk): in production these come from consts.SMPL_MEAN_PARAMS_PATH.
    mean_pose = 0.1 * jax.random.normal(k_pose, (24 * 6,), jnp.float32)
    mean_shape = 0.1 * jax.random.normal(k_shape, (10,), jnp.float32)
    init_params = jnp.concatenate(
        [jnp.array([0.9, 0.0, 0.0], jnp.float32), mean_pose, mean_shape])

    # Linear weights in (in, out) layout; biases zero-initialized as in __init__.
    w1 = 0.02 * jax.random.normal(k_w1, (IN_FEATURES + NUM_PARAMS, H1), jnp.float32)
    b1 = jnp.zeros((H1,), jnp.float32)
    w2 = 0.02 * jax.random.normal(k_w2, (H1, H2), jnp.float32)
    b2 = jnp.zeros((H2,), jnp.float32)
    w3 = 0.02 * jax.random.normal(k_w3, (H2, NUM_PARAMS), jnp.float32)
    b3 = jnp.zeros((NUM_PARAMS,), jnp.float32)

    # One-time weight prep (padding, concat-split, peeled-iter bias, bf16 cast).
    wts = prepare_ief_weights(init_params, w1, b1, w2, b2, w3, b3)

    cam, pose, shape = ief_forward(img_features, wts)
    jax.block_until_ready((cam, pose, shape))

    cam_r, pose_r, shape_r = ief_reference(img_features, init_params,
                                           w1, b1, w2, b2, w3, b3)
    assert cam.shape == (BATCH, 3)
    assert pose.shape == (BATCH, 24 * 6)
    assert shape.shape == (BATCH, 10)
    # bf16 MXU operands with f32 accumulation: small, bounded deviation vs f32 ref.
    assert jnp.allclose(cam, cam_r, atol=2e-3)
    assert jnp.allclose(pose, pose_r, atol=2e-3)
    assert jnp.allclose(shape, shape_r, atol=2e-3)

    print("KERNEL_OK")
</pallas_src>

<mosaic_0001>
module attributes {stable_mosaic.version = 11 : i64} {
  func.func @ief_kernel(%arg0: i32, %arg1: memref<8x128xf32, #tpu.memory_space<vmem>>, %arg2: memref<1x256xf32, #tpu.memory_space<vmem>>, %arg3: memref<128x128xbf16, #tpu.memory_space<vmem>>, %arg4: memref<256x128xbf16, #tpu.memory_space<vmem>>, %arg5: memref<1x128xf32, #tpu.memory_space<vmem>>, %arg6: memref<1x128xf32, #tpu.memory_space<vmem>>, %arg7: memref<128x128xbf16, #tpu.memory_space<vmem>>, %arg8: memref<1x128xf32, #tpu.memory_space<vmem>>, %arg9: memref<128x256xbf16, #tpu.memory_space<vmem>>, %arg10: memref<1x256xf32, #tpu.memory_space<vmem>>, %arg11: memref<8x256xf32, #tpu.memory_space<vmem>>, %arg12: memref<8x256xf32, #tpu.memory_space<vmem>>, %arg13: memref<8x128xf32, #tpu.memory_space<vmem>>) attributes {dimension_semantics = [#tpu.dimension_semantics<parallel>], iteration_bounds = array<i64: 1>, scalar_prefetch = 0 : i64, scratch_operands = 2 : i64, tpu.core_type = #tpu.core_type<tc>, window_params = [{transform_indices = @transform_0, window_bounds = array<i64: 8, 128>}, {pipeline_mode = #tpu.pipeline_mode<synchronous>, transform_indices = @transform_1, window_bounds = array<i64: 1, 256>}, {pipeline_mode = #tpu.pipeline_mode<synchronous>, transform_indices = @transform_2, window_bounds = array<i64: 128, 128>}, {pipeline_mode = #tpu.pipeline_mode<synchronous>, transform_indices = @transform_3, window_bounds = array<i64: 256, 128>}, {pipeline_mode = #tpu.pipeline_mode<synchronous>, transform_indices = @transform_4, window_bounds = array<i64: 1, 128>}, {pipeline_mode = #tpu.pipeline_mode<synchronous>, transform_indices = @transform_5, window_bounds = array<i64: 1, 128>}, {pipeline_mode = #tpu.pipeline_mode<synchronous>, transform_indices = @transform_6, window_bounds = array<i64: 128, 128>}, {pipeline_mode = #tpu.pipeline_mode<synchronous>, transform_indices = @transform_7, window_bounds = array<i64: 1, 128>}, {pipeline_mode = #tpu.pipeline_mode<synchronous>, transform_indices = @transform_8, window_bounds = array<i64: 128, 256>}, {pipeline_mode = #tpu.pipeline_mode<synchronous>, transform_indices = @transform_9, window_bounds = array<i64: 1, 256>}, {transform_indices = @transform_10, window_bounds = array<i64: 8, 256>}]} {
    %c0 = arith.constant 0 : index
    %c0_0 = arith.constant 0 : index
    %0 = vector.load %arg1[%c0, %c0_0] : memref<8x128xf32, #tpu.memory_space<vmem>>, vector<8x128xf32>
    %1 = arith.truncf %0 : vector<8x128xf32> to vector<8x128xbf16>
    %c0_1 = arith.constant 0 : index
    %c0_2 = arith.constant 0 : index
    %2 = vector.load %arg3[%c0_1, %c0_2] : memref<128x128xbf16, #tpu.memory_space<vmem>>, vector<128x128xbf16>
    %cst = arith.constant dense<0.000000e+00> : vector<8x128xf32>
    %3 = tpu.matmul %1, %2, %cst {dimension_numbers = #tpu.dot_dimension_numbers<[1], [0], [0], [1], [0, 0, 1, 1], [], []>} : vector<8x128xbf16>, vector<128x128xbf16>, vector<8x128xf32> -> vector<8x128xf32>
    %c0_3 = arith.constant 0 : index
    %c0_4 = arith.constant 0 : index
    %4 = vector.load %arg13[%c0_3, %c0_4] : memref<8x128xf32, #tpu.memory_space<vmem>>, vector<8x128xf32>
    tpu.vector_store %arg13[%c0_3, %c0_4], %3 {strides = array<i32>} : memref<8x128xf32, #tpu.memory_space<vmem>>, vector<8x128xf32>,
    %c0_5 = arith.constant 0 : index
    %c0_6 = arith.constant 0 : index
    %5 = vector.load %arg13[%c0_5, %c0_6] : memref<8x128xf32, #tpu.memory_space<vmem>>, vector<8x128xf32>
    %c0_7 = arith.constant 0 : index
    %c0_8 = arith.constant 0 : index
    %6 = vector.load %arg6[%c0_7, %c0_8] : memref<1x128xf32, #tpu.memory_space<vmem>>, vector<1x128xf32>
    %7 = vector.broadcast %6 : vector<1x128xf32> to vector<8x128xf32>
    %8 = arith.addf %5, %7 : vector<8x128xf32>
    %cst_9 = arith.constant 0.000000e+00 : f32
    %9 = vector.broadcast %cst_9 : f32 to vector<8x128xf32>
    %10 = arith.maximumf %8, %9 : vector<8x128xf32>
    %11 = arith.truncf %10 : vector<8x128xf32> to vector<8x128xbf16>
    %c0_10 = arith.constant 0 : index
    %c0_11 = arith.constant 0 : index
    %12 = vector.load %arg7[%c0_10, %c0_11] : memref<128x128xbf16, #tpu.memory_space<vmem>>, vector<128x128xbf16>
    %cst_12 = arith.constant dense<0.000000e+00> : vector<8x128xf32>
    %13 = tpu.matmul %11, %12, %cst_12 {dimension_numbers = #tpu.dot_dimension_numbers<[1], [0], [0], [1], [0, 0, 1, 1], [], []>} : vector<8x128xbf16>, vector<128x128xbf16>, vector<8x128xf32> -> vector<8x128xf32>
    %c0_13 = arith.constant 0 : index
    %c0_14 = arith.constant 0 : index
    %14 = vector.load %arg8[%c0_13, %c0_14] : memref<1x128xf32, #tpu.memory_space<vmem>>, vector<1x128xf32>
    %15 = vector.broadcast %14 : vector<1x128xf32> to vector<8x128xf32>
    %16 = arith.addf %13, %15 : vector<8x128xf32>
    %cst_15 = arith.constant 0.000000e+00 : f32
    %17 = vector.broadcast %cst_15 : f32 to vector<8x128xf32>
    %18 = arith.maximumf %16, %17 : vector<8x128xf32>
    %19 = arith.truncf %18 : vector<8x128xf32> to vector<8x128xbf16>
    %c0_16 = arith.constant 0 : index
    %c0_17 = arith.constant 0 : index
    %20 = vector.load %arg9[%c0_16, %c0_17] : memref<128x256xbf16, #tpu.memory_space<vmem>>, vector<128x256xbf16>
    %cst_18 = arith.constant dense<0.000000e+00> : vector<8x256xf32>
    %21 = tpu.matmul %19, %20, %cst_18 {dimension_numbers = #tpu.dot_dimension_numbers<[1], [0], [0], [1], [0, 0, 1, 1], [], []>} : vector<8x128xbf16>, vector<128x256xbf16>, vector<8x256xf32> -> vector<8x256xf32>
    %c0_19 = arith.constant 0 : index
    %c0_20 = arith.constant 0 : index
    %22 = vector.load %arg10[%c0_19, %c0_20] : memref<1x256xf32, #tpu.memory_space<vmem>>, vector<1x256xf32>
    %23 = vector.broadcast %22 : vector<1x256xf32> to vector<8x256xf32>
    %24 = arith.addf %21, %23 : vector<8x256xf32>
    %c0_21 = arith.constant 0 : index
    %c0_22 = arith.constant 0 : index
    %25 = vector.load %arg2[%c0_21, %c0_22] : memref<1x256xf32, #tpu.memory_space<vmem>>, vector<1x256xf32>
    %26 = vector.shape_cast %25 : vector<1x256xf32> to vector<1x256xf32>
    %27 = vector.broadcast %26 : vector<1x256xf32> to vector<8x256xf32>
    %28 = arith.addf %27, %24 : vector<8x256xf32>
    %c0_23 = arith.constant 0 : index
    %c0_24 = arith.constant 0 : index
    %29 = vector.load %arg12[%c0_23, %c0_24] : memref<8x256xf32, #tpu.memory_space<vmem>>, vector<8x256xf32>
    tpu.vector_store %arg12[%c0_23, %c0_24], %28 {strides = array<i32>} : memref<8x256xf32, #tpu.memory_space<vmem>>, vector<8x256xf32>,
    %c0_25 = arith.constant 0 : index
    %c0_26 = arith.constant 0 : index
    %30 = vector.load %arg13[%c0_25, %c0_26] : memref<8x128xf32, #tpu.memory_space<vmem>>, vector<8x128xf32>
    %c0_27 = arith.constant 0 : index
    %c0_28 = arith.constant 0 : index
    %31 = vector.load %arg5[%c0_27, %c0_28] : memref<1x128xf32, #tpu.memory_space<vmem>>, vector<1x128xf32>
    %32 = vector.broadcast %31 : vector<1x128xf32> to vector<8x128xf32>
    %33 = arith.addf %30, %32 : vector<8x128xf32>
    %c0_29 = arith.constant 0 : index
    %c0_30 = arith.constant 0 : index
    %34 = vector.load %arg12[%c0_29, %c0_30] : memref<8x256xf32, #tpu.memory_space<vmem>>, vector<8x256xf32>
    %35 = arith.truncf %34 : vector<8x256xf32> to vector<8x256xbf16>
    %c0_31 = arith.constant 0 : index
    %c0_32 = arith.constant 0 : index
    %36 = vector.load %arg4[%c0_31, %c0_32] : memref<256x128xbf16, #tpu.memory_space<vmem>>, vector<256x128xbf16>
    %cst_33 = arith.constant dense<0.000000e+00> : vector<8x128xf32>
    %37 = tpu.matmul %35, %36, %cst_33 {dimension_numbers = #tpu.dot_dimension_numbers<[1], [0], [0], [1], [0, 0, 1, 1], [], []>} : vector<8x256xbf16>, vector<256x128xbf16>, vector<8x128xf32> -> vector<8x128xf32>
    %38 = arith.addf %33, %37 : vector<8x128xf32>
    %cst_34 = arith.constant 0.000000e+00 : f32
    %39 = vector.broadcast %cst_34 : f32 to vector<8x128xf32>
    %40 = arith.maximumf %38, %39 : vector<8x128xf32>
    %41 = arith.truncf %40 : vector<8x128xf32> to vector<8x128xbf16>
    %c0_35 = arith.constant 0 : index
    %c0_36 = arith.constant 0 : index
    %42 = vector.load %arg7[%c0_35, %c0_36] : memref<128x128xbf16, #tpu.memory_space<vmem>>, vector<128x128xbf16>
    %cst_37 = arith.constant dense<0.000000e+00> : vector<8x128xf32>
    %43 = tpu.matmul %41, %42, %cst_37 {dimension_numbers = #tpu.dot_dimension_numbers<[1], [0], [0], [1], [0, 0, 1, 1], [], []>} : vector<8x128xbf16>, vector<128x128xbf16>, vector<8x128xf32> -> vector<8x128xf32>
    %c0_38 = arith.constant 0 : index
    %c0_39 = arith.constant 0 : index
    %44 = vector.load %arg8[%c0_38, %c0_39] : memref<1x128xf32, #tpu.memory_space<vmem>>, vector<1x128xf32>
    %45 = vector.broadcast %44 : vector<1x128xf32> to vector<8x128xf32>
    %46 = arith.addf %43, %45 : vector<8x128xf32>
    %cst_40 = arith.constant 0.000000e+00 : f32
    %47 = vector.broadcast %cst_40 : f32 to vector<8x128xf32>
    %48 = arith.maximumf %46, %47 : vector<8x128xf32>
    %49 = arith.truncf %48 : vector<8x128xf32> to vector<8x128xbf16>
    %c0_41 = arith.constant 0 : index
    %c0_42 = arith.constant 0 : index
    %50 = vector.load %arg9[%c0_41, %c0_42] : memref<128x256xbf16, #tpu.memory_space<vmem>>, vector<128x256xbf16>
    %cst_43 = arith.constant dense<0.000000e+00> : vector<8x256xf32>
    %51 = tpu.matmul %49, %50, %cst_43 {dimension_numbers = #tpu.dot_dimension_numbers<[1], [0], [0], [1], [0, 0, 1, 1], [], []>} : vector<8x128xbf16>, vector<128x256xbf16>, vector<8x256xf32> -> vector<8x256xf32>
    %c0_44 = arith.constant 0 : index
    %c0_45 = arith.constant 0 : index
    %52 = vector.load %arg10[%c0_44, %c0_45] : memref<1x256xf32, #tpu.memory_space<vmem>>, vector<1x256xf32>
    %53 = vector.broadcast %52 : vector<1x256xf32> to vector<8x256xf32>
    %54 = arith.addf %51, %53 : vector<8x256xf32>
    %c0_46 = arith.constant 0 : index
    %c0_47 = arith.constant 0 : index
    %55 = vector.load %arg12[%c0_46, %c0_47] : memref<8x256xf32, #tpu.memory_space<vmem>>, vector<8x256xf32>
    %56 = arith.addf %55, %54 : vector<8x256xf32>
    %c0_48 = arith.constant 0 : index
    %c0_49 = arith.constant 0 : index
    %57 = vector.load %arg12[%c0_48, %c0_49] : memref<8x256xf32, #tpu.memory_space<vmem>>, vector<8x256xf32>
    tpu.vector_store %arg12[%c0_48, %c0_49], %56 {strides = array<i32>} : memref<8x256xf32, #tpu.memory_space<vmem>>, vector<8x256xf32>,
    %c0_50 = arith.constant 0 : index
    %c0_51 = arith.constant 0 : index
    %58 = vector.load %arg13[%c0_50, %c0_51] : memref<8x128xf32, #tpu.memory_space<vmem>>, vector<8x128xf32>
    %c0_52 = arith.constant 0 : index
    %c0_53 = arith.constant 0 : index
    %59 = vector.load %arg5[%c0_52, %c0_53] : memref<1x128xf32, #tpu.memory_space<vmem>>, vector<1x128xf32>
    %60 = vector.broadcast %59 : vector<1x128xf32> to vector<8x128xf32>
    %61 = arith.addf %58, %60 : vector<8x128xf32>
    %c0_54 = arith.constant 0 : index
    %c0_55 = arith.constant 0 : index
    %62 = vector.load %arg12[%c0_54, %c0_55] : memref<8x256xf32, #tpu.memory_space<vmem>>, vector<8x256xf32>
    %63 = arith.truncf %62 : vector<8x256xf32> to vector<8x256xbf16>
    %c0_56 = arith.constant 0 : index
    %c0_57 = arith.constant 0 : index
    %64 = vector.load %arg4[%c0_56, %c0_57] : memref<256x128xbf16, #tpu.memory_space<vmem>>, vector<256x128xbf16>
    %cst_58 = arith.constant dense<0.000000e+00> : vector<8x128xf32>
    %65 = tpu.matmul %63, %64, %cst_58 {dimension_numbers = #tpu.dot_dimension_numbers<[1], [0], [0], [1], [0, 0, 1, 1], [], []>} : vector<8x256xbf16>, vector<256x128xbf16>, vector<8x128xf32> -> vector<8x128xf32>
    %66 = arith.addf %61, %65 : vector<8x128xf32>
    %cst_59 = arith.constant 0.000000e+00 : f32
    %67 = vector.broadcast %cst_59 : f32 to vector<8x128xf32>
    %68 = arith.maximumf %66, %67 : vector<8x128xf32>
    %69 = arith.truncf %68 : vector<8x128xf32> to vector<8x128xbf16>
    %c0_60 = arith.constant 0 : index
    %c0_61 = arith.constant 0 : index
    %70 = vector.load %arg7[%c0_60, %c0_61] : memref<128x128xbf16, #tpu.memory_space<vmem>>, vector<128x128xbf16>
    %cst_62 = arith.constant dense<0.000000e+00> : vector<8x128xf32>
    %71 = tpu.matmul %69, %70, %cst_62 {dimension_numbers = #tpu.dot_dimension_numbers<[1], [0], [0], [1], [0, 0, 1, 1], [], []>} : vector<8x128xbf16>, vector<128x128xbf16>, vector<8x128xf32> -> vector<8x128xf32>
    %c0_63 = arith.constant 0 : index
    %c0_64 = arith.constant 0 : index
    %72 = vector.load %arg8[%c0_63, %c0_64] : memref<1x128xf32, #tpu.memory_space<vmem>>, vector<1x128xf32>
    %73 = vector.broadcast %72 : vector<1x128xf32> to vector<8x128xf32>
    %74 = arith.addf %71, %73 : vector<8x128xf32>
    %cst_65 = arith.constant 0.000000e+00 : f32
    %75 = vector.broadcast %cst_65 : f32 to vector<8x128xf32>
    %76 = arith.maximumf %74, %75 : vector<8x128xf32>
    %77 = arith.truncf %76 : vector<8x128xf32> to vector<8x128xbf16>
    %c0_66 = arith.constant 0 : index
    %c0_67 = arith.constant 0 : index
    %78 = vector.load %arg9[%c0_66, %c0_67] : memref<128x256xbf16, #tpu.memory_space<vmem>>, vector<128x256xbf16>
    %cst_68 = arith.constant dense<0.000000e+00> : vector<8x256xf32>
    %79 = tpu.matmul %77, %78, %cst_68 {dimension_numbers = #tpu.dot_dimension_numbers<[1], [0], [0], [1], [0, 0, 1, 1], [], []>} : vector<8x128xbf16>, vector<128x256xbf16>, vector<8x256xf32> -> vector<8x256xf32>
    %c0_69 = arith.constant 0 : index
    %c0_70 = arith.constant 0 : index
    %80 = vector.load %arg10[%c0_69, %c0_70] : memref<1x256xf32, #tpu.memory_space<vmem>>, vector<1x256xf32>
    %81 = vector.broadcast %80 : vector<1x256xf32> to vector<8x256xf32>
    %82 = arith.addf %79, %81 : vector<8x256xf32>
    %c0_71 = arith.constant 0 : index
    %c0_72 = arith.constant 0 : index
    %83 = vector.load %arg12[%c0_71, %c0_72] : memref<8x256xf32, #tpu.memory_space<vmem>>, vector<8x256xf32>
    %84 = arith.addf %83, %82 : vector<8x256xf32>
    %c0_73 = arith.constant 0 : index
    %c0_74 = arith.constant 0 : index
    %85 = vector.load %arg12[%c0_73, %c0_74] : memref<8x256xf32, #tpu.memory_space<vmem>>, vector<8x256xf32>
    tpu.vector_store %arg12[%c0_73, %c0_74], %84 {strides = array<i32>} : memref<8x256xf32, #tpu.memory_space<vmem>>, vector<8x256xf32>,
    %c0_75 = arith.constant 0 : index
    %c0_76 = arith.constant 0 : index
    %86 = vector.load %arg12[%c0_75, %c0_76] : memref<8x256xf32, #tpu.memory_space<vmem>>, vector<8x256xf32>
    %c0_77 = arith.constant 0 : index
    %c0_78 = arith.constant 0 : index
    %87 = vector.load %arg11[%c0_77, %c0_78] : memref<8x256xf32, #tpu.memory_space<vmem>>, vector<8x256xf32>
    tpu.vector_store %arg11[%c0_77, %c0_78], %86 {strides = array<i32>} : memref<8x256xf32, #tpu.memory_space<vmem>>, vector<8x256xf32>,
    return
  }
  func.func @transform_0(%arg0: i32) -> (i32, i32) {
    %c0_i32 = arith.constant 0 : i32
    %c0_i32_0 = arith.constant 0 : i32
    return %arg0, %c0_i32 : i32, i32
  }
  func.func @transform_1(%arg0: i32) -> (i32, i32) {
    %c0_i32 = arith.constant 0 : i32
    %c0_i32_0 = arith.constant 0 : i32
    %c0_i32_1 = arith.constant 0 : i32
    return %c0_i32, %c0_i32_0 : i32, i32
  }
  func.func @transform_2(%arg0: i32) -> (i32, i32) {
    %c0_i32 = arith.constant 0 : i32
    %c0_i32_0 = arith.constant 0 : i32
    %c0_i32_1 = arith.constant 0 : i32
    return %c0_i32, %c0_i32_0 : i32, i32
  }
  func.func @transform_3(%arg0: i32) -> (i32, i32) {
    %c0_i32 = arith.constant 0 : i32
    %c0_i32_0 = arith.constant 0 : i32
    %c0_i32_1 = arith.constant 0 : i32
    return %c0_i32, %c0_i32_0 : i32, i32
  }
  func.func @transform_4(%arg0: i32) -> (i32, i32) {
    %c0_i32 = arith.constant 0 : i32
    %c0_i32_0 = arith.constant 0 : i32
    %c0_i32_1 = arith.constant 0 : i32
    return %c0_i32, %c0_i32_0 : i32, i32
  }
  func.func @transform_5(%arg0: i32) -> (i32, i32) {
    %c0_i32 = arith.constant 0 : i32
    %c0_i32_0 = arith.constant 0 : i32
    %c0_i32_1 = arith.constant 0 : i32
    return %c0_i32, %c0_i32_0 : i32, i32
  }
  func.func @transform_6(%arg0: i32) -> (i32, i32) {
    %c0_i32 = arith.constant 0 : i32
    %c0_i32_0 = arith.constant 0 : i32
    %c0_i32_1 = arith.constant 0 : i32
    return %c0_i32, %c0_i32_0 : i32, i32
  }
  func.func @transform_7(%arg0: i32) -> (i32, i32) {
    %c0_i32 = arith.constant 0 : i32
    %c0_i32_0 = arith.constant 0 : i32
    %c0_i32_1 = arith.constant 0 : i32
    return %c0_i32, %c0_i32_0 : i32, i32
  }
  func.func @transform_8(%arg0: i32) -> (i32, i32) {
    %c0_i32 = arith.constant 0 : i32
    %c0_i32_0 = arith.constant 0 : i32
    %c0_i32_1 = arith.constant 0 : i32
    return %c0_i32, %c0_i32_0 : i32, i32
  }
  func.func @transform_9(%arg0: i32) -> (i32, i32) {
    %c0_i32 = arith.constant 0 : i32
    %c0_i32_0 = arith.constant 0 : i32
    %c0_i32_1 = arith.constant 0 : i32
    return %c0_i32, %c0_i32_0 : i32, i32
  }
  func.func @transform_10(%arg0: i32) -> (i32, i32) {
    %c0_i32 = arith.constant 0 : i32
    %c0_i32_0 = arith.constant 0 : i32
    return %arg0, %c0_i32 : i32, i32
  }
}

</mosaic_0001>

<llo_original>
// kernel: tpu_custom_call.1
$region0: #{tpu_custom_call.1}
  #allocation0 [shape = 'u32[]', space=smem, size = 0x4, offset = 0x4, fixed_abs, tag = 'smem constant byte address 0x4 - core index']
  #allocation1 [shape = 'u32[144,128]{1,0:T(1,128)}', space=vmem, size = 0x12000, scoped, tag = 'internal scratch']
  #allocation2 [shape = 'f32[8,256]{1,0:T(8,128)}', space=vmem, size = 0x2000, scoped, tag = 'scratch operand']
  #allocation3 [shape = 'f32[8,128]{1,0:T(8,128)}', space=vmem, size = 0x1000, scoped, tag = 'scratch operand']
  %s0 = inlined_call_operand.hbm [shape: f32[8,128], index: 0, kind: input, shape index: {}]
  %s1 = inlined_call_operand.hbm [shape: f32[1,256], index: 1, kind: input, shape index: {}]
  %s2 = inlined_call_operand.hbm [shape: bf16[128,128], index: 2, kind: input, shape index: {}]
  %s3 = inlined_call_operand.hbm [shape: bf16[256,128], index: 3, kind: input, shape index: {}]
  %s4 = inlined_call_operand.vmem [shape: f32[1,128], index: 4, kind: input, shape index: {}]
  %s5 = inlined_call_operand.vmem [shape: f32[1,128], index: 5, kind: input, shape index: {}]
  %s6 = inlined_call_operand.hbm [shape: bf16[128,128], index: 6, kind: input, shape index: {}]
  %s7 = inlined_call_operand.vmem [shape: f32[1,128], index: 7, kind: input, shape index: {}]
  %s8 = inlined_call_operand.hbm [shape: bf16[128,256], index: 8, kind: input, shape index: {}]
  %s9 = inlined_call_operand.vmem [shape: f32[1,256], index: 9, kind: input, shape index: {}]
  %s10 = inlined_call_operand.hbm [shape: f32[8,256], index: 10, kind: output, shape index: {}]
  %s11 = sld [smem:[#allocation0]]
  $region74: #{tpu_custom_call.1} parent=0
    _
  %s13 = ssub.s32 1, %s11
  %s14 = scalar_select 0, %s13, %s11
  $region1: #{tpu_custom_call.1} parent=0
    #allocation4 [shape = 'u8[4096]{0}', space=vmem, size = 0x1000, scoped, tag = 'input window, operand 0, single buffered']
    #allocation5 [shape = 's32[1]{0}', space=sflag, size = 0x4, scoped, tag = 'scoped memory for tpu_custom_call.1']
    #allocation6 [shape = 's32[1]{0}', space=sflag, size = 0x4, scoped, tag = 'scoped memory for tpu_custom_call.1']
    #allocation7 [shape = 'u8[1024]{0}', space=vmem, size = 0x400, scoped, tag = 'input window, operand 1, single buffered']
    #allocation8 [shape = 's32[1]{0}', space=sflag, size = 0x4, scoped, tag = 'scoped memory for tpu_custom_call.1']
    #allocation9 [shape = 'u8[32768]{0}', space=vmem, size = 0x8000, scoped, tag = 'input window, operand 2, single buffered']
    #allocation10 [shape = 'u8[65536]{0}', space=vmem, size = 0x10000, scoped, tag = 'input window, operand 3, single buffered']
    #allocation11 [shape = 's32[1]{0}', space=sflag, size = 0x4, scoped, tag = 'scoped memory for tpu_custom_call.1']
    #allocation12 [shape = 'u8[32768]{0}', space=vmem, size = 0x8000, scoped, tag = 'input window, operand 6, single buffered']
    #allocation13 [shape = 'u8[65536]{0}', space=vmem, size = 0x10000, scoped, tag = 'input window, operand 8, single buffered']
    #allocation14 [shape = 's32[1]{0}', space=sflag, size = 0x4, scoped, tag = 'scoped memory for tpu_custom_call.1']
    #allocation15 [shape = 'u8[8192]{0}', space=vmem, size = 0x2000, scoped, tag = 'output window, operand 0, single buffered']
    %15 = vsyncpa [#allocation5], 0
    %16 = vsyncpa [#allocation8], 0
    %17 = vsyncpa [#allocation11], 0
    %18 = vsyncpa [#allocation14], 0
    %19 = vsyncpa [#allocation6], 0
    // Predicated region
    $region2: #{tpu_custom_call.1} parent=1 // pred_check
      _
    $region3: #{tpu_custom_call.1} parent=1 // pred_check_branch
      %21 = sbr.rel (0) target = $region5
    $region4: #{tpu_custom_call.1} parent=1 // pred_region
      %s23 = ssub.s32 128, 128
      %24 = vsyncadd [#allocation5], %s23
      %s26 = sshll.u32 [#allocation4], 4
      %s27 = int_to_ptr.vmem [resolvable:$true] %s26
      %29 = dma.hbm_to_vmem [thread:$0]  %s0, 128, %s27, [#allocation5]
    $region5: #{tpu_custom_call.1} parent=1 // pred_fallthru
      _
    // Predicated region
    $region6: #{tpu_custom_call.1} parent=1 // pred_check
      _
    $region7: #{tpu_custom_call.1} parent=1 // pred_check_branch
      %31 = sbr.rel (0) target = $region9
    $region8: #{tpu_custom_call.1} parent=1 // pred_region
      %s33 = ssub.s32 32, 32
      %34 = vsyncadd [#allocation8], %s33
      %s36 = sshll.u32 [#allocation7], 4
      %s37 = int_to_ptr.vmem [resolvable:$true] %s36
      %39 = dma.hbm_to_vmem [thread:$0]  %s1, 32, %s37, [#allocation8]
    $region9: #{tpu_custom_call.1} parent=1 // pred_fallthru
      _
    // Predicated region
    $region10: #{tpu_custom_call.1} parent=1 // pred_check
      _
    $region11: #{tpu_custom_call.1} parent=1 // pred_check_branch
      %41 = sbr.rel (0) target = $region13
    $region12: #{tpu_custom_call.1} parent=1 // pred_region
      %s43 = ssub.s32 1024, 1024
      %44 = vsyncadd [#allocation8], %s43
      %s45 = sshll.u32 [#allocation9], 4
      %s46 = int_to_ptr.vmem [resolvable:$true] %s45
      %51 = dma.hbm_to_vmem [thread:$0]  %s2, 1024, %s46, [#allocation8], 64, 64, 4
    $region13: #{tpu_custom_call.1} parent=1 // pred_fallthru
      _
    // Predicated region
    $region14: #{tpu_custom_call.1} parent=1 // pred_check
      _
    $region15: #{tpu_custom_call.1} parent=1 // pred_check_branch
      %53 = sbr.rel (0) target = $region17
    $region16: #{tpu_custom_call.1} parent=1 // pred_region
      %s55 = ssub.s32 2048, 2048
      %56 = vsyncadd [#allocation11], %s55
      %s57 = sshll.u32 [#allocation10], 4
      %s58 = int_to_ptr.vmem [resolvable:$true] %s57
      %63 = dma.hbm_to_vmem [thread:$0]  %s3, 2048, %s58, [#allocation11], 64, 64, 4
    $region17: #{tpu_custom_call.1} parent=1 // pred_fallthru
      _
    // Predicated region
    $region18: #{tpu_custom_call.1} parent=1 // pred_check
      _
    $region19: #{tpu_custom_call.1} parent=1 // pred_check_branch
      %65 = sbr.rel (0) target = $region21
    $region20: #{tpu_custom_call.1} parent=1 // pred_region
      _
    $region21: #{tpu_custom_call.1} parent=1 // pred_fallthru
      _
    // Predicated region
    $region22: #{tpu_custom_call.1} parent=1 // pred_check
      _
    $region23: #{tpu_custom_call.1} parent=1 // pred_check_branch
      %67 = sbr.rel (0) target = $region25
    $region24: #{tpu_custom_call.1} parent=1 // pred_region
      _
    $region25: #{tpu_custom_call.1} parent=1 // pred_fallthru
      _
    // Predicated region
    $region26: #{tpu_custom_call.1} parent=1 // pred_check
      _
    $region27: #{tpu_custom_call.1} parent=1 // pred_check_branch
      %69 = sbr.rel (0) target = $region29
    $region28: #{tpu_custom_call.1} parent=1 // pred_region
      %s71 = ssub.s32 1024, 1024
      %72 = vsyncadd [#allocation11], %s71
      %s73 = sshll.u32 [#allocation12], 4
      %s74 = int_to_ptr.vmem [resolvable:$true] %s73
      %79 = dma.hbm_to_vmem [thread:$0]  %s6, 1024, %s74, [#allocation11], 64, 64, 4
    $region29: #{tpu_custom_call.1} parent=1 // pred_fallthru
      _
    // Predicated region
    $region30: #{tpu_custom_call.1} parent=1 // pred_check
      _
    $region31: #{tpu_custom_call.1} parent=1 // pred_check_branch
      %81 = sbr.rel (0) target = $region33
    $region32: #{tpu_custom_call.1} parent=1 // pred_region
      _
    $region33: #{tpu_custom_call.1} parent=1 // pred_fallthru
      _
    // Predicated region
    $region34: #{tpu_custom_call.1} parent=1 // pred_check
      _
    $region35: #{tpu_custom_call.1} parent=1 // pred_check_branch
      %83 = sbr.rel (0) target = $region37
    $region36: #{tpu_custom_call.1} parent=1 // pred_region
      %s85 = ssub.s32 2048, 2048
      %86 = vsyncadd [#allocation14], %s85
      %s87 = sshll.u32 [#allocation13], 4
      %s88 = int_to_ptr.vmem [resolvable:$true] %s87
      %93 = dma.hbm_to_vmem [thread:$0]  %s8, 2048, %s88, [#allocation14], 128, 128, 8
    $region37: #{tpu_custom_call.1} parent=1 // pred_fallthru
      _
    // Predicated region
    $region38: #{tpu_custom_call.1} parent=1 // pred_check
      _
    $region39: #{tpu_custom_call.1} parent=1 // pred_check_branch
      %95 = sbr.rel (0) target = $region41
    $region40: #{tpu_custom_call.1} parent=1 // pred_region
      _
    $region41: #{tpu_custom_call.1} parent=1 // pred_fallthru
      _
    // Predicated region
    $region42: #{tpu_custom_call.1} parent=1 // pred_check
      _
    $region43: #{tpu_custom_call.1} parent=1 // pred_check_branch
      %97 = sbr.rel (0) target = $region45
    $region44: #{tpu_custom_call.1} parent=1 // pred_region
      %98 = dma.done [#allocation5], 128
    $region45: #{tpu_custom_call.1} parent=1 // pred_fallthru
      _
    // Predicated region
    $region46: #{tpu_custom_call.1} parent=1 // pred_check
      _
    $region47: #{tpu_custom_call.1} parent=1 // pred_check_branch
      %100 = sbr.rel (0) target = $region49
    $region48: #{tpu_custom_call.1} parent=1 // pred_region
      %101 = dma.done [#allocation8], 32
    $region49: #{tpu_custom_call.1} parent=1 // pred_fallthru
      _
    // Predicated region
    $region50: #{tpu_custom_call.1} parent=1 // pred_check
      _
    $region51: #{tpu_custom_call.1} parent=1 // pred_check_branch
      %103 = sbr.rel (0) target = $region53
    $region52: #{tpu_custom_call.1} parent=1 // pred_region
      %104 = dma.done [#allocation8], 1024
    $region53: #{tpu_custom_call.1} parent=1 // pred_fallthru
      _
    // Predicated region
    $region54: #{tpu_custom_call.1} parent=1 // pred_check
      _
    $region55: #{tpu_custom_call.1} parent=1 // pred_check_branch
      %106 = sbr.rel (0) target = $region57
    $region56: #{tpu_custom_call.1} parent=1 // pred_region
      %107 = dma.done [#allocation11], 2048
    $region57: #{tpu_custom_call.1} parent=1 // pred_fallthru
      _
    // Predicated region
    $region58: #{tpu_custom_call.1} parent=1 // pred_check
      _
    $region59: #{tpu_custom_call.1} parent=1 // pred_check_branch
      %109 = sbr.rel (0) target = $region61
    $region60: #{tpu_custom_call.1} parent=1 // pred_region
      %110 = dma.done [#allocation11], 1024
    $region61: #{tpu_custom_call.1} parent=1 // pred_fallthru
      _
    // Predicated region
    $region62: #{tpu_custom_call.1} parent=1 // pred_check
      _
    $region63: #{tpu_custom_call.1} parent=1 // pred_check_branch
      %112 = sbr.rel (0) target = $region65
    $region64: #{tpu_custom_call.1} parent=1 // pred_region
      %113 = dma.done [#allocation14], 2048
    $region65: #{tpu_custom_call.1} parent=1 // pred_fallthru
      _
    %v115 = vld [vmem:[#allocation4] sm:$0xff]
    %v116 = vpack.c.bf16 %v115, %v115
    %v117 = vld [vmem:[#allocation9] sm:$0xf]
    %v118 = vld [vmem:[#allocation9 + $0x4] sm:$0xf]
    %v119 = vld [vmem:[#allocation9 + $0x8] sm:$0xf]
    %v120 = vld [vmem:[#allocation9 + $0xc] sm:$0xf]
    %v121 = vld [vmem:[#allocation9 + $0x10] sm:$0xf]
    %v122 = vld [vmem:[#allocation9 + $0x14] sm:$0xf]
    %v123 = vld [vmem:[#allocation9 + $0x18] sm:$0xf]
    %v124 = vld [vmem:[#allocation9 + $0x1c] sm:$0xf]
    %v125 = vld [vmem:[#allocation9 + $0x20] sm:$0xf]
    %v126 = vld [vmem:[#allocation9 + $0x24] sm:$0xf]
    %v127 = vld [vmem:[#allocation9 + $0x28] sm:$0xf]
    %v128 = vld [vmem:[#allocation9 + $0x2c] sm:$0xf]
    %v129 = vld [vmem:[#allocation9 + $0x30] sm:$0xf]
    %v130 = vld [vmem:[#allocation9 + $0x34] sm:$0xf]
    %v131 = vld [vmem:[#allocation9 + $0x38] sm:$0xf]
    %v132 = vld [vmem:[#allocation9 + $0x3c] sm:$0xf]
    %v149 = vunpack.c.l.b16 %v117
    %v150 = vunpack.c.l.b16 %v118
    %v151 = vunpack.c.l.b16 %v119
    %v152 = vunpack.c.l.b16 %v120
    %v153 = vunpack.c.l.b16 %v121
    %v154 = vunpack.c.l.b16 %v122
    %v155 = vunpack.c.l.b16 %v123
    %v156 = vunpack.c.l.b16 %v124
    %v157 = vunpack.c.l.b16 %v125
    %v158 = vunpack.c.l.b16 %v126
    %v159 = vunpack.c.l.b16 %v127
    %v160 = vunpack.c.l.b16 %v128
    %v161 = vunpack.c.l.b16 %v129
    %v162 = vunpack.c.l.b16 %v130
    %v163 = vunpack.c.l.b16 %v131
    %v164 = vunpack.c.l.b16 %v132
    %v165 = vpack.c.b16 %v150, %v149
    %v166 = vpack.c.b16 %v152, %v151
    %v167 = vpack.c.b16 %v154, %v153
    %v168 = vpack.c.b16 %v156, %v155
    %v169 = vpack.c.b16 %v158, %v157
    %v170 = vpack.c.b16 %v160, %v159
    %v171 = vpack.c.b16 %v162, %v161
    %v172 = vpack.c.b16 %v164, %v163
    %181 = vmatprep.subr.bf16.mxu0 0
    %182 = vmatpush1.bf16.msra.mxu0 %v172
    %183 = vmatprep.subr.bf16.mxu0 0
    %184 = vmatpush1.bf16.msra.mxu0 %v171
    %185 = vmatprep.subr.bf16.mxu0 0
    %186 = vmatpush1.bf16.msra.mxu0 %v170
    %187 = vmatprep.subr.bf16.mxu0 0
    %188 = vmatpush1.bf16.msra.mxu0 %v169
    %189 = vmatprep.subr.bf16.mxu0 0
    %190 = vmatpush1.bf16.msra.mxu0 %v168
    %191 = vmatprep.subr.bf16.mxu0 0
    %192 = vmatpush1.bf16.msra.mxu0 %v167
    %193 = vmatprep.subr.bf16.mxu0 0
    %194 = vmatpush1.bf16.msra.mxu0 %v166
    %195 = vmatprep.subr.bf16.mxu0 0
    %196 = vmatpush1.bf16.msra.mxu0 %v165
    %197 = vmatprep.subr.bf16.mxu0 0
    %198 = vmatpush2.bf16.msra.mxu0 0
    %199 = vmatprep.subr.bf16.mxu0 0
    %200 = vmatpush2.bf16.msra.mxu0 0
    %201 = vmatprep.subr.bf16.mxu0 0
    %202 = vmatpush2.bf16.msra.mxu0 0
    %203 = vmatprep.subr.bf16.mxu0 0
    %204 = vmatpush2.bf16.msra.mxu0 0
    %205 = vmatprep.subr.bf16.mxu0 0
    %206 = vmatpush2.bf16.msra.mxu0 0
    %207 = vmatprep.subr.bf16.mxu0 0
    %208 = vmatpush2.bf16.msra.mxu0 0
    %209 = vmatprep.subr.bf16.mxu0 0
    %210 = vmatpush2.bf16.msra.mxu0 0
    %211 = vmatprep.subr.bf16.mxu0 0
    %212 = vmatpush2.bf16.msra.mxu0 0
    %213 = vmatprep.mubr.bf16.mxu0 0
    %214 = vmatmul.mubr.bf16.gmra.mxu0 %v116
    %v215 = vpop.f32.mrf.mxu0
    %v216 = vadd.f32 0.0, %v215
    %v217 = vpop.f32.mrf.mxu0
    %v218 = vpop.f32.mrf.mxu0
    %v219 = vpop.f32.mrf.mxu0
    %220 = vdwg.mxu0
    %221 = vst [vmem:[#allocation3] sm:$0xff] %v216
    %v222 = vld [vmem:[#allocation3] sm:$0xff]
    %v223 = vld [vmem:[%s5] sm:$0x1]
    %v225 = vlaneseq
    %v226 = vshrl.u32 %v225, 7
    %v227 = vsub.s32 0, %v226
    %v228 = vrot.slane %v223, %v227
    %v230 = vadd.f32 %v222, %v228
    %v231 = vmax.f32 %v230, 0.0
    %v232 = vpack.c.bf16 %v231, %v231
    %v233 = vld [vmem:[#allocation12] sm:$0xf]
    %v234 = vld [vmem:[#allocation12 + $0x4] sm:$0xf]
    %v235 = vld [vmem:[#allocation12 + $0x8] sm:$0xf]
    %v236 = vld [vmem:[#allocation12 + $0xc] sm:$0xf]
    %v237 = vld [vmem:[#allocation12 + $0x10] sm:$0xf]
    %v238 = vld [vmem:[#allocation12 + $0x14] sm:$0xf]
    %v239 = vld [vmem:[#allocation12 + $0x18] sm:$0xf]
    %v240 = vld [vmem:[#allocation12 + $0x1c] sm:$0xf]
    %v241 = vld [vmem:[#allocation12 + $0x20] sm:$0xf]
    %v242 = vld [vmem:[#allocation12 + $0x24] sm:$0xf]
    %v243 = vld [vmem:[#allocation12 + $0x28] sm:$0xf]
    %v244 = vld [vmem:[#allocation12 + $0x2c] sm:$0xf]
    %v245 = vld [vmem:[#allocation12 + $0x30] sm:$0xf]
    %v246 = vld [vmem:[#allocation12 + $0x34] sm:$0xf]
    %v247 = vld [vmem:[#allocation12 + $0x38] sm:$0xf]
    %v248 = vld [vmem:[#allocation12 + $0x3c] sm:$0xf]
    %v249 = vld [vmem:[%s7] sm:$0x1]
    %v251 = vlaneseq
    %v252 = vshrl.u32 %v251, 7
    %v253 = vsub.s32 0, %v252
    %v254 = vrot.slane %v249, %v253
    %v272 = vunpack.c.l.b16 %v233
    %v273 = vunpack.c.l.b16 %v234
    %v274 = vunpack.c.l.b16 %v235
    %v275 = vunpack.c.l.b16 %v236
    %v276 = vunpack.c.l.b16 %v237
    %v277 = vunpack.c.l.b16 %v238
    %v278 = vunpack.c.l.b16 %v239
    %v279 = vunpack.c.l.b16 %v240
    %v280 = vunpack.c.l.b16 %v241
    %v281 = vunpack.c.l.b16 %v242
    %v282 = vunpack.c.l.b16 %v243
    %v283 = vunpack.c.l.b16 %v244
    %v284 = vunpack.c.l.b16 %v245
    %v285 = vunpack.c.l.b16 %v246
    %v286 = vunpack.c.l.b16 %v247
    %v287 = vunpack.c.l.b16 %v248
    %v288 = vpack.c.b16 %v273, %v272
    %v289 = vpack.c.b16 %v275, %v274
    %v290 = vpack.c.b16 %v277, %v276
    %v291 = vpack.c.b16 %v279, %v278
    %v292 = vpack.c.b16 %v281, %v280
    %v293 = vpack.c.b16 %v283, %v282
    %v294 = vpack.c.b16 %v285, %v284
    %v295 = vpack.c.b16 %v287, %v286
    %304 = vmatprep.subr.bf16.mxu0 0
    %305 = vmatpush1.bf16.msra.mxu0 %v295
    %306 = vmatprep.subr.bf16.mxu0 0
    %307 = vmatpush1.bf16.msra.mxu0 %v294
    %308 = vmatprep.subr.bf16.mxu0 0
    %309 = vmatpush1.bf16.msra.mxu0 %v293
    %310 = vmatprep.subr.bf16.mxu0 0
    %311 = vmatpush1.bf16.msra.mxu0 %v292
    %312 = vmatprep.subr.bf16.mxu0 0
    %313 = vmatpush1.bf16.msra.mxu0 %v291
    %314 = vmatprep.subr.bf16.mxu0 0
    %315 = vmatpush1.bf16.msra.mxu0 %v290
    %316 = vmatprep.subr.bf16.mxu0 0
    %317 = vmatpush1.bf16.msra.mxu0 %v289
    %318 = vmatprep.subr.bf16.mxu0 0
    %319 = vmatpush1.bf16.msra.mxu0 %v288
    %320 = vmatprep.subr.bf16.mxu0 0
    %321 = vmatpush2.bf16.msra.mxu0 0
    %322 = vmatprep.subr.bf16.mxu0 0
    %323 = vmatpush2.bf16.msra.mxu0 0
    %324 = vmatprep.subr.bf16.mxu0 0
    %325 = vmatpush2.bf16.msra.mxu0 0
    %326 = vmatprep.subr.bf16.mxu0 0
    %327 = vmatpush2.bf16.msra.mxu0 0
    %328 = vmatprep.subr.bf16.mxu0 0
    %329 = vmatpush2.bf16.msra.mxu0 0
    %330 = vmatprep.subr.bf16.mxu0 0
    %331 = vmatpush2.bf16.msra.mxu0 0
    %332 = vmatprep.subr.bf16.mxu0 0
    %333 = vmatpush2.bf16.msra.mxu0 0
    %334 = vmatprep.subr.bf16.mxu0 0
    %335 = vmatpush2.bf16.msra.mxu0 0
    %336 = vmatprep.mubr.bf16.mxu0 0
    %337 = vmatmul.mubr.bf16.gmra.mxu0 %v232
    %v338 = vpop.f32.mrf.mxu0
    %v339 = vadd.f32 %v254, %v338
    %v340 = vpop.f32.mrf.mxu0
    %v341 = vpop.f32.mrf.mxu0
    %v342 = vpop.f32.mrf.mxu0
    %343 = vdwg.mxu0
    %v344 = vmax.f32 %v339, 0.0
    %v345 = vpack.c.bf16 %v344, %v344
    %v346 = vld [vmem:[#allocation13] sm:$0xff]
    %v347 = vld [vmem:[#allocation13 + $0x8] sm:$0xff]
    %v348 = vld [vmem:[#allocation13 + $0x10] sm:$0xff]
    %v349 = vld [vmem:[#allocation13 + $0x18] sm:$0xff]
    %v350 = vld [vmem:[#allocation13 + $0x20] sm:$0xff]
    %v351 = vld [vmem:[#allocation13 + $0x28] sm:$0xff]
    %v352 = vld [vmem:[#allocation13 + $0x30] sm:$0xff]
    %v353 = vld [vmem:[#allocation13 + $0x38] sm:$0xff]
    %v354 = vld [vmem:[#allocation13 + $0x40] sm:$0xff]
    %v355 = vld [vmem:[#allocation13 + $0x48] sm:$0xff]
    %v356 = vld [vmem:[#allocation13 + $0x50] sm:$0xff]
    %v357 = vld [vmem:[#allocation13 + $0x58] sm:$0xff]
    %v358 = vld [vmem:[#allocation13 + $0x60] sm:$0xff]
    %v359 = vld [vmem:[#allocation13 + $0x68] sm:$0xff]
    %v360 = vld [vmem:[#allocation13 + $0x70] sm:$0xff]
    %v361 = vld [vmem:[#allocation13 + $0x78] sm:$0xff]
    %v362 = vld [vmem:[%s9] sm:$0x3]
    %v364 = vlaneseq
    %v365 = vshrl.u32 %v364, 7
    %v366 = vsub.s32 0, %v365
    %v367 = vrot.slane %v362, %v366
    %v368 = vlaneseq
    %v369 = vshrl.u32 %v368, 7
    %v370 = vsub.s32 1, %v369
    %v371 = vrot.slane %v362, %v370
    %v390 = vunpack.c.l.b16 %v346
    %v391 = vunpack.c.h.b16 %v346
    %v392 = vunpack.c.l.b16 %v347
    %v393 = vunpack.c.h.b16 %v347
    %v394 = vunpack.c.l.b16 %v348
    %v395 = vunpack.c.h.b16 %v348
    %v396 = vunpack.c.l.b16 %v349
    %v397 = vunpack.c.h.b16 %v349
    %v398 = vunpack.c.l.b16 %v350
    %v399 = vunpack.c.h.b16 %v350
    %v400 = vunpack.c.l.b16 %v351
    %v401 = vunpack.c.h.b16 %v351
    %v402 = vunpack.c.l.b16 %v352
    %v403 = vunpack.c.h.b16 %v352
    %v404 = vunpack.c.l.b16 %v353
    %v405 = vunpack.c.h.b16 %v353
    %v406 = vunpack.c.l.b16 %v354
    %v407 = vunpack.c.h.b16 %v354
    %v408 = vunpack.c.l.b16 %v355
    %v409 = vunpack.c.h.b16 %v355
    %v410 = vunpack.c.l.b16 %v356
    %v411 = vunpack.c.h.b16 %v356
    %v412 = vunpack.c.l.b16 %v357
    %v413 = vunpack.c.h.b16 %v357
    %v414 = vunpack.c.l.b16 %v358
    %v415 = vunpack.c.h.b16 %v358
    %v416 = vunpack.c.l.b16 %v359
    %v417 = vunpack.c.h.b16 %v359
    %v418 = vunpack.c.l.b16 %v360
    %v419 = vunpack.c.h.b16 %v360
    %v420 = vunpack.c.l.b16 %v361
    %v421 = vunpack.c.h.b16 %v361
    %v422 = vpack.c.b16 %v392, %v390
    %v423 = vpack.c.b16 %v393, %v391
    %v424 = vpack.c.b16 %v396, %v394
    %v425 = vpack.c.b16 %v397, %v395
    %v426 = vpack.c.b16 %v400, %v398
    %v427 = vpack.c.b16 %v401, %v399
    %v428 = vpack.c.b16 %v404, %v402
    %v429 = vpack.c.b16 %v405, %v403
    %v430 = vpack.c.b16 %v408, %v406
    %v431 = vpack.c.b16 %v409, %v407
    %v432 = vpack.c.b16 %v412, %v410
    %v433 = vpack.c.b16 %v413, %v411
    %v434 = vpack.c.b16 %v416, %v414
    %v435 = vpack.c.b16 %v417, %v415
    %v436 = vpack.c.b16 %v420, %v418
    %v437 = vpack.c.b16 %v421, %v419
    %454 = vmatprep.subr.bf16.mxu0 %v437
    %455 = vmatpush1.bf16.msra.mxu0 %v436
    %456 = vmatprep.subr.bf16.mxu0 %v435
    %457 = vmatpush1.bf16.msra.mxu0 %v434
    %458 = vmatprep.subr.bf16.mxu0 %v433
    %459 = vmatpush1.bf16.msra.mxu0 %v432
    %460 = vmatprep.subr.bf16.mxu0 %v431
    %461 = vmatpush1.bf16.msra.mxu0 %v430
    %462 = vmatprep.subr.bf16.mxu0 %v429
    %463 = vmatpush1.bf16.msra.mxu0 %v428
    %464 = vmatprep.subr.bf16.mxu0 %v427
    %465 = vmatpush1.bf16.msra.mxu0 %v426
    %466 = vmatprep.subr.bf16.mxu0 %v425
    %467 = vmatpush1.bf16.msra.mxu0 %v424
    %468 = vmatprep.subr.bf16.mxu0 %v423
    %469 = vmatpush1.bf16.msra.mxu0 %v422
    %470 = vmatprep.subr.bf16.mxu0 0
    %471 = vmatpush2.bf16.msra.mxu0 0
    %472 = vmatprep.subr.bf16.mxu0 0
    %473 = vmatpush2.bf16.msra.mxu0 0
    %474 = vmatprep.subr.bf16.mxu0 0
    %475 = vmatpush2.bf16.msra.mxu0 0
    %476 = vmatprep.subr.bf16.mxu0 0
    %477 = vmatpush2.bf16.msra.mxu0 0
    %478 = vmatprep.subr.bf16.mxu0 0
    %479 = vmatpush2.bf16.msra.mxu0 0
    %480 = vmatprep.subr.bf16.mxu0 0
    %481 = vmatpush2.bf16.msra.mxu0 0
    %482 = vmatprep.subr.bf16.mxu0 0
    %483 = vmatpush2.bf16.msra.mxu0 0
    %484 = vmatprep.subr.bf16.mxu0 0
    %485 = vmatpush2.bf16.msra.mxu0 0
    %486 = vmatprep.mubr.bf16.mxu0 0
    %487 = vmatmul.mubr.bf16.gmra.mxu0 %v345
    %v488 = vpop.f32.mrf.mxu0
    %v489 = vadd.f32 %v367, %v488
    %v490 = vpop.f32.mrf.mxu0
    %v491 = vadd.f32 %v371, %v490
    %v492 = vpop.f32.mrf.mxu0
    %v493 = vpop.f32.mrf.mxu0
    %494 = vdwg.mxu0
    %v495 = vld [vmem:[#allocation7] sm:$0x3]
    %v497 = vlaneseq
    %v498 = vshrl.u32 %v497, 7
    %v499 = vsub.s32 0, %v498
    %v500 = vrot.slane %v495, %v499
    %v501 = vlaneseq
    %v502 = vshrl.u32 %v501, 7
    %v503 = vsub.s32 1, %v502
    %v504 = vrot.slane %v495, %v503
    %v507 = vadd.f32 %v500, %v489
    %v508 = vadd.f32 %v504, %v491
    %509 = vst [vmem:[#allocation2] sm:$0xff] %v507
    %510 = vst [vmem:[#allocation2 + $0x8] sm:$0xff] %v508
    %v511 = vld [vmem:[#allocation3] sm:$0xff]
    %v512 = vld [vmem:[%s4] sm:$0x1]
    %v514 = vlaneseq
    %v515 = vshrl.u32 %v514, 7
    %v516 = vsub.s32 0, %v515
    %v517 = vrot.slane %v512, %v516
    %v519 = vadd.f32 %v511, %v517
    %v520 = vld [vmem:[#allocation2] sm:$0xff]
    %v521 = vld [vmem:[#allocation2 + $0x8] sm:$0xff]
    %v522 = vpack.c.bf16 %v520, %v520
    %v523 = vpack.c.bf16 %v521, %v521
    %v524 = vld [vmem:[#allocation10] sm:$0xf]
    %v525 = vld [vmem:[#allocation10 + $0x4] sm:$0xf]
    %v526 = vld [vmem:[#allocation10 + $0x8] sm:$0xf]
    %v527 = vld [vmem:[#allocation10 + $0xc] sm:$0xf]
    %v528 = vld [vmem:[#allocation10 + $0x10] sm:$0xf]
    %v529 = vld [vmem:[#allocation10 + $0x14] sm:$0xf]
    %v530 = vld [vmem:[#allocation10 + $0x18] sm:$0xf]
    %v531 = vld [vmem:[#allocation10 + $0x1c] sm:$0xf]
    %v532 = vld [vmem:[#allocation10 + $0x20] sm:$0xf]
    %v533 = vld [vmem:[#allocation10 + $0x24] sm:$0xf]
    %v534 = vld [vmem:[#allocation10 + $0x28] sm:$0xf]
    %v535 = vld [vmem:[#allocation10 + $0x2c] sm:$0xf]
    %v536 = vld [vmem:[#allocation10 + $0x30] sm:$0xf]
    %v537 = vld [vmem:[#allocation10 + $0x34] sm:$0xf]
    %v538 = vld [vmem:[#allocation10 + $0x38] sm:$0xf]
    %v539 = vld [vmem:[#allocation10 + $0x3c] sm:$0xf]
    %v540 = vld [vmem:[#allocation10 + $0x40] sm:$0xf]
    %v541 = vld [vmem:[#allocation10 + $0x44] sm:$0xf]
    %v542 = vld [vmem:[#allocation10 + $0x48] sm:$0xf]
    %v543 = vld [vmem:[#allocation10 + $0x4c] sm:$0xf]
    %v544 = vld [vmem:[#allocation10 + $0x50] sm:$0xf]
    %v545 = vld [vmem:[#allocation10 + $0x54] sm:$0xf]
    %v546 = vld [vmem:[#allocation10 + $0x58] sm:$0xf]
    %v547 = vld [vmem:[#allocation10 + $0x5c] sm:$0xf]
    %v548 = vld [vmem:[#allocation10 + $0x60] sm:$0xf]
    %v549 = vld [vmem:[#allocation10 + $0x64] sm:$0xf]
    %v550 = vld [vmem:[#allocation10 + $0x68] sm:$0xf]
    %v551 = vld [vmem:[#allocation10 + $0x6c] sm:$0xf]
    %v552 = vld [vmem:[#allocation10 + $0x70] sm:$0xf]
    %v553 = vld [vmem:[#allocation10 + $0x74] sm:$0xf]
    %v554 = vld [vmem:[#allocation10 + $0x78] sm:$0xf]
    %v555 = vld [vmem:[#allocation10 + $0x7c] sm:$0xf]
    %v588 = vunpack.c.l.b16 %v524
    %v589 = vunpack.c.l.b16 %v525
    %v590 = vunpack.c.l.b16 %v526
    %v591 = vunpack.c.l.b16 %v527
    %v592 = vunpack.c.l.b16 %v528
    %v593 = vunpack.c.l.b16 %v529
    %v594 = vunpack.c.l.b16 %v530
    %v595 = vunpack.c.l.b16 %v531
    %v596 = vunpack.c.l.b16 %v532
    %v597 = vunpack.c.l.b16 %v533
    %v598 = vunpack.c.l.b16 %v534
    %v599 = vunpack.c.l.b16 %v535
    %v600 = vunpack.c.l.b16 %v536
    %v601 = vunpack.c.l.b16 %v537
    %v602 = vunpack.c.l.b16 %v538
    %v603 = vunpack.c.l.b16 %v539
    %v604 = vunpack.c.l.b16 %v540
    %v605 = vunpack.c.l.b16 %v541
    %v606 = vunpack.c.l.b16 %v542
    %v607 = vunpack.c.l.b16 %v543
    %v608 = vunpack.c.l.b16 %v544
    %v609 = vunpack.c.l.b16 %v545
    %v610 = vunpack.c.l.b16 %v546
    %v611 = vunpack.c.l.b16 %v547
    %v612 = vunpack.c.l.b16 %v548
    %v613 = vunpack.c.l.b16 %v549
    %v614 = vunpack.c.l.b16 %v550
    %v615 = vunpack.c.l.b16 %v551
    %v616 = vunpack.c.l.b16 %v552
    %v617 = vunpack.c.l.b16 %v553
    %v618 = vunpack.c.l.b16 %v554
    %v619 = vunpack.c.l.b16 %v555
    %v620 = vpack.c.b16 %v589, %v588
    %v621 = vpack.c.b16 %v591, %v590
    %v622 = vpack.c.b16 %v593, %v592
    %v623 = vpack.c.b16 %v595, %v594
    %v624 = vpack.c.b16 %v597, %v596
    %v625 = vpack.c.b16 %v599, %v598
    %v626 = vpack.c.b16 %v601, %v600
    %v627 = vpack.c.b16 %v603, %v602
    %v628 = vpack.c.b16 %v605, %v604
    %v629 = vpack.c.b16 %v607, %v606
    %v630 = vpack.c.b16 %v609, %v608
    %v631 = vpack.c.b16 %v611, %v610
    %v632 = vpack.c.b16 %v613, %v612
    %v633 = vpack.c.b16 %v615, %v614
    %v634 = vpack.c.b16 %v617, %v616
    %v635 = vpack.c.b16 %v619, %v618
    %652 = vmatprep.subr.bf16.mxu0 0
    %653 = vmatpush1.bf16.msra.mxu0 %v627
    %654 = vmatprep.subr.bf16.mxu0 0
    %655 = vmatpush1.bf16.msra.mxu0 %v626
    %656 = vmatprep.subr.bf16.mxu0 0
    %657 = vmatpush1.bf16.msra.mxu0 %v625
    %658 = vmatprep.subr.bf16.mxu0 0
    %659 = vmatpush1.bf16.msra.mxu0 %v624
    %660 = vmatprep.subr.bf16.mxu0 0
    %661 = vmatpush1.bf16.msra.mxu0 %v623
    %662 = vmatprep.subr.bf16.mxu0 0
    %663 = vmatpush1.bf16.msra.mxu0 %v622
    %664 = vmatprep.subr.bf16.mxu0 0
    %665 = vmatpush1.bf16.msra.mxu0 %v621
    %666 = vmatprep.subr.bf16.mxu0 0
    %667 = vmatpush1.bf16.msra.mxu0 %v620
    %668 = vmatprep.subr.bf16.mxu0 0
    %669 = vmatpush2.bf16.msra.mxu0 %v635
    %670 = vmatprep.subr.bf16.mxu0 0
    %671 = vmatpush2.bf16.msra.mxu0 %v634
    %672 = vmatprep.subr.bf16.mxu0 0
    %673 = vmatpush2.bf16.msra.mxu0 %v633
    %674 = vmatprep.subr.bf16.mxu0 0
    %675 = vmatpush2.bf16.msra.mxu0 %v632
    %676 = vmatprep.subr.bf16.mxu0 0
    %677 = vmatpush2.bf16.msra.mxu0 %v631
    %678 = vmatprep.subr.bf16.mxu0 0
    %679 = vmatpush2.bf16.msra.mxu0 %v630
    %680 = vmatprep.subr.bf16.mxu0 0
    %681 = vmatpush2.bf16.msra.mxu0 %v629
    %682 = vmatprep.subr.bf16.mxu0 0
    %683 = vmatpush2.bf16.msra.mxu0 %v628
    %684 = vmatprep.mubr.bf16.mxu0 %v523
    %685 = vmatmul.mubr.bf16.gmra.mxu0 %v522
    %v686 = vpop.f32.mrf.mxu0
    %v687 = vadd.f32 0.0, %v686
    %v688 = vpop.f32.mrf.mxu0
    %v689 = vpop.f32.mrf.mxu0
    %v690 = vpop.f32.mrf.mxu0
    %691 = vdwg.mxu0
    %v692 = vadd.f32 %v519, %v687
    %v693 = vmax.f32 %v692, 0.0
    %v694 = vpack.c.bf16 %v693, %v693
    %v695 = vld [vmem:[#allocation12] sm:$0xf]
    %v696 = vld [vmem:[#allocation12 + $0x4] sm:$0xf]
    %v697 = vld [vmem:[#allocation12 + $0x8] sm:$0xf]
    %v698 = vld [vmem:[#allocation12 + $0xc] sm:$0xf]
    %v699 = vld [vmem:[#allocation12 + $0x10] sm:$0xf]
    %v700 = vld [vmem:[#allocation12 + $0x14] sm:$0xf]
    %v701 = vld [vmem:[#allocation12 + $0x18] sm:$0xf]
    %v702 = vld [vmem:[#allocation12 + $0x1c] sm:$0xf]
    %v703 = vld [vmem:[#allocation12 + $0x20] sm:$0xf]
    %v704 = vld [vmem:[#allocation12 + $0x24] sm:$0xf]
    %v705 = vld [vmem:[#allocation12 + $0x28] sm:$0xf]
    %v706 = vld [vmem:[#allocation12 + $0x2c] sm:$0xf]
    %v707 = vld [vmem:[#allocation12 + $0x30] sm:$0xf]
    %v708 = vld [vmem:[#allocation12 + $0x34] sm:$0xf]
    %v709 = vld [vmem:[#allocation12 + $0x38] sm:$0xf]
    %v710 = vld [vmem:[#allocation12 + $0x3c] sm:$0xf]
    %v711 = vld [vmem:[%s7] sm:$0x1]
    %v713 = vlaneseq
    %v714 = vshrl.u32 %v713, 7
    %v715 = vsub.s32 0, %v714
    %v716 = vrot.slane %v711, %v715
    %v734 = vunpack.c.l.b16 %v695
    %v735 = vunpack.c.l.b16 %v696
    %v736 = vunpack.c.l.b16 %v697
    %v737 = vunpack.c.l.b16 %v698
    %v738 = vunpack.c.l.b16 %v699
    %v739 = vunpack.c.l.b16 %v700
    %v740 = vunpack.c.l.b16 %v701
    %v741 = vunpack.c.l.b16 %v702
    %v742 = vunpack.c.l.b16 %v703
    %v743 = vunpack.c.l.b16 %v704
    %v744 = vunpack.c.l.b16 %v705
    %v745 = vunpack.c.l.b16 %v706
    %v746 = vunpack.c.l.b16 %v707
    %v747 = vunpack.c.l.b16 %v708
    %v748 = vunpack.c.l.b16 %v709
    %v749 = vunpack.c.l.b16 %v710
    %v750 = vpack.c.b16 %v735, %v734
    %v751 = vpack.c.b16 %v737, %v736
    %v752 = vpack.c.b16 %v739, %v738
    %v753 = vpack.c.b16 %v741, %v740
    %v754 = vpack.c.b16 %v743, %v742
    %v755 = vpack.c.b16 %v745, %v744
    %v756 = vpack.c.b16 %v747, %v746
    %v757 = vpack.c.b16 %v749, %v748
    %766 = vmatprep.subr.bf16.mxu0 0
    %767 = vmatpush1.bf16.msra.mxu0 %v757
    %768 = vmatprep.subr.bf16.mxu0 0
    %769 = vmatpush1.bf16.msra.mxu0 %v756
    %770 = vmatprep.subr.bf16.mxu0 0
    %771 = vmatpush1.bf16.msra.mxu0 %v755
    %772 = vmatprep.subr.bf16.mxu0 0
    %773 = vmatpush1.bf16.msra.mxu0 %v754
    %774 = vmatprep.subr.bf16.mxu0 0
    %775 = vmatpush1.bf16.msra.mxu0 %v753
    %776 = vmatprep.subr.bf16.mxu0 0
    %777 = vmatpush1.bf16.msra.mxu0 %v752
    %778 = vmatprep.subr.bf16.mxu0 0
    %779 = vmatpush1.bf16.msra.mxu0 %v751
    %780 = vmatprep.subr.bf16.mxu0 0
    %781 = vmatpush1.bf16.msra.mxu0 %v750
    %782 = vmatprep.subr.bf16.mxu0 0
    %783 = vmatpush2.bf16.msra.mxu0 0
    %784 = vmatprep.subr.bf16.mxu0 0
    %785 = vmatpush2.bf16.msra.mxu0 0
    %786 = vmatprep.subr.bf16.mxu0 0
    %787 = vmatpush2.bf16.msra.mxu0 0
    %788 = vmatprep.subr.bf16.mxu0 0
    %789 = vmatpush2.bf16.msra.mxu0 0
    %790 = vmatprep.subr.bf16.mxu0 0
    %791 = vmatpush2.bf16.msra.mxu0 0
    %792 = vmatprep.subr.bf16.mxu0 0
    %793 = vmatpush2.bf16.msra.mxu0 0
    %794 = vmatprep.subr.bf16.mxu0 0
    %795 = vmatpush2.bf16.msra.mxu0 0
    %796 = vmatprep.subr.bf16.mxu0 0
    %797 = vmatpush2.bf16.msra.mxu0 0
    %798 = vmatprep.mubr.bf16.mxu0 0
    %799 = vmatmul.mubr.bf16.gmra.mxu0 %v694
    %v800 = vpop.f32.mrf.mxu0
    %v801 = vadd.f32 %v716, %v800
    %v802 = vpop.f32.mrf.mxu0
    %v803 = vpop.f32.mrf.mxu0
    %v804 = vpop.f32.mrf.mxu0
    %805 = vdwg.mxu0
    %v806 = vmax.f32 %v801, 0.0
    %v807 = vpack.c.bf16 %v806, %v806
    %v808 = vld [vmem:[#allocation13] sm:$0xff]
    %v809 = vld [vmem:[#allocation13 + $0x8] sm:$0xff]
    %v810 = vld [vmem:[#allocation13 + $0x10] sm:$0xff]
    %v811 = vld [vmem:[#allocation13 + $0x18] sm:$0xff]
    %v812 = vld [vmem:[#allocation13 + $0x20] sm:$0xff]
    %v813 = vld [vmem:[#allocation13 + $0x28] sm:$0xff]
    %v814 = vld [vmem:[#allocation13 + $0x30] sm:$0xff]
    %v815 = vld [vmem:[#allocation13 + $0x38] sm:$0xff]
    %v816 = vld [vmem:[#allocation13 + $0x40] sm:$0xff]
    %v817 = vld [vmem:[#allocation13 + $0x48] sm:$0xff]
    %v818 = vld [vmem:[#allocation13 + $0x50] sm:$0xff]
    %v819 = vld [vmem:[#allocation13 + $0x58] sm:$0xff]
    %v820 = vld [vmem:[#allocation13 + $0x60] sm:$0xff]
    %v821 = vld [vmem:[#allocation13 + $0x68] sm:$0xff]
    %v822 = vld [vmem:[#allocation13 + $0x70] sm:$0xff]
    %v823 = vld [vmem:[#allocation13 + $0x78] sm:$0xff]
    %v824 = vld [vmem:[%s9] sm:$0x3]
    %v826 = vlaneseq
    %v827 = vshrl.u32 %v826, 7
    %v828 = vsub.s32 0, %v827
    %v829 = vrot.slane %v824, %v828
    %v830 = vlaneseq
    %v831 = vshrl.u32 %v830, 7
    %v832 = vsub.s32 1, %v831
    %v833 = vrot.slane %v824, %v832
    %v852 = vunpack.c.l.b16 %v808
    %v853 = vunpack.c.h.b16 %v808
    %v854 = vunpack.c.l.b16 %v809
    %v855 = vunpack.c.h.b16 %v809
    %v856 = vunpack.c.l.b16 %v810
    %v857 = vunpack.c.h.b16 %v810
    %v858 = vunpack.c.l.b16 %v811
    %v859 = vunpack.c.h.b16 %v811
    %v860 = vunpack.c.l.b16 %v812
    %v861 = vunpack.c.h.b16 %v812
    %v862 = vunpack.c.l.b16 %v813
    %v863 = vunpack.c.h.b16 %v813
    %v864 = vunpack.c.l.b16 %v814
    %v865 = vunpack.c.h.b16 %v814
    %v866 = vunpack.c.l.b16 %v815
    %v867 = vunpack.c.h.b16 %v815
    %v868 = vunpack.c.l.b16 %v816
    %v869 = vunpack.c.h.b16 %v816
    %v870 = vunpack.c.l.b16 %v817
    %v871 = vunpack.c.h.b16 %v817
    %v872 = vunpack.c.l.b16 %v818
    %v873 = vunpack.c.h.b16 %v818
    %v874 = vunpack.c.l.b16 %v819
    %v875 = vunpack.c.h.b16 %v819
    %v876 = vunpack.c.l.b16 %v820
    %v877 = vunpack.c.h.b16 %v820
    %v878 = vunpack.c.l.b16 %v821
    %v879 = vunpack.c.h.b16 %v821
    %v880 = vunpack.c.l.b16 %v822
    %v881 = vunpack.c.h.b16 %v822
    %v882 = vunpack.c.l.b16 %v823
    %v883 = vunpack.c.h.b16 %v823
    %v884 = vpack.c.b16 %v854, %v852
    %v885 = vpack.c.b16 %v855, %v853
    %v886 = vpack.c.b16 %v858, %v856
    %v887 = vpack.c.b16 %v859, %v857
    %v888 = vpack.c.b16 %v862, %v860
    %v889 = vpack.c.b16 %v863, %v861
    %v890 = vpack.c.b16 %v866, %v864
    %v891 = vpack.c.b16 %v867, %v865
    %v892 = vpack.c.b16 %v870, %v868
    %v893 = vpack.c.b16 %v871, %v869
    %v894 = vpack.c.b16 %v874, %v872
    %v895 = vpack.c.b16 %v875, %v873
    %v896 = vpack.c.b16 %v878, %v876
    %v897 = vpack.c.b16 %v879, %v877
    %v898 = vpack.c.b16 %v882, %v880
    %v899 = vpack.c.b16 %v883, %v881
    %916 = vmatprep.subr.bf16.mxu0 %v899
    %917 = vmatpush1.bf16.msra.mxu0 %v898
    %918 = vmatprep.subr.bf16.mxu0 %v897
    %919 = vmatpush1.bf16.msra.mxu0 %v896
    %920 = vmatprep.subr.bf16.mxu0 %v895
    %921 = vmatpush1.bf16.msra.mxu0 %v894
    %922 = vmatprep.subr.bf16.mxu0 %v893
    %923 = vmatpush1.bf16.msra.mxu0 %v892
    %924 = vmatprep.subr.bf16.mxu0 %v891
    %925 = vmatpush1.bf16.msra.mxu0 %v890
    %926 = vmatprep.subr.bf16.mxu0 %v889
    %927 = vmatpush1.bf16.msra.mxu0 %v888
    %928 = vmatprep.subr.bf16.mxu0 %v887
    %929 = vmatpush1.bf16.msra.mxu0 %v886
    %930 = vmatprep.subr.bf16.mxu0 %v885
    %931 = vmatpush1.bf16.msra.mxu0 %v884
    %932 = vmatprep.subr.bf16.mxu0 0
    %933 = vmatpush2.bf16.msra.mxu0 0
    %934 = vmatprep.subr.bf16.mxu0 0
    %935 = vmatpush2.bf16.msra.mxu0 0
    %936 = vmatprep.subr.bf16.mxu0 0
    %937 = vmatpush2.bf16.msra.mxu0 0
    %938 = vmatprep.subr.bf16.mxu0 0
    %939 = vmatpush2.bf16.msra.mxu0 0
    %940 = vmatprep.subr.bf16.mxu0 0
    %941 = vmatpush2.bf16.msra.mxu0 0
    %942 = vmatprep.subr.bf16.mxu0 0
    %943 = vmatpush2.bf16.msra.mxu0 0
    %944 = vmatprep.subr.bf16.mxu0 0
    %945 = vmatpush2.bf16.msra.mxu0 0
    %946 = vmatprep.subr.bf16.mxu0 0
    %947 = vmatpush2.bf16.msra.mxu0 0
    %948 = vmatprep.mubr.bf16.mxu0 0
    %949 = vmatmul.mubr.bf16.gmra.mxu0 %v807
    %v950 = vpop.f32.mrf.mxu0
    %v951 = vadd.f32 %v829, %v950
    %v952 = vpop.f32.mrf.mxu0
    %v953 = vadd.f32 %v833, %v952
    %v954 = vpop.f32.mrf.mxu0
    %v955 = vpop.f32.mrf.mxu0
    %956 = vdwg.mxu0
    %v957 = vadd.f32 %v520, %v951
    %v958 = vadd.f32 %v521, %v953
    %959 = vst [vmem:[#allocation2] sm:$0xff] %v957
    %960 = vst [vmem:[#allocation2 + $0x8] sm:$0xff] %v958
    %v961 = vld [vmem:[#allocation3] sm:$0xff]
    %v962 = vld [vmem:[%s4] sm:$0x1]
    %v964 = vlaneseq
    %v965 = vshrl.u32 %v964, 7
    %v966 = vsub.s32 0, %v965
    %v967 = vrot.slane %v962, %v966
    %v969 = vadd.f32 %v961, %v967
    %v970 = vld [vmem:[#allocation2] sm:$0xff]
    %v971 = vld [vmem:[#allocation2 + $0x8] sm:$0xff]
    %v972 = vpack.c.bf16 %v970, %v970
    %v973 = vpack.c.bf16 %v971, %v971
    %v974 = vld [vmem:[#allocation10] sm:$0xf]
    %v975 = vld [vmem:[#allocation10 + $0x4] sm:$0xf]
    %v976 = vld [vmem:[#allocation10 + $0x8] sm:$0xf]
    %v977 = vld [vmem:[#allocation10 + $0xc] sm:$0xf]
    %v978 = vld [vmem:[#allocation10 + $0x10] sm:$0xf]
    %v979 = vld [vmem:[#allocation10 + $0x14] sm:$0xf]
    %v980 = vld [vmem:[#allocation10 + $0x18] sm:$0xf]
    %v981 = vld [vmem:[#allocation10 + $0x1c] sm:$0xf]
    %v982 = vld [vmem:[#allocation10 + $0x20] sm:$0xf]
    %v983 = vld [vmem:[#allocation10 + $0x24] sm:$0xf]
    %v984 = vld [vmem:[#allocation10 + $0x28] sm:$0xf]
    %v985 = vld [vmem:[#allocation10 + $0x2c] sm:$0xf]
    %v986 = vld [vmem:[#allocation10 + $0x30] sm:$0xf]
    %v987 = vld [vmem:[#allocation10 + $0x34] sm:$0xf]
    %v988 = vld [vmem:[#allocation10 + $0x38] sm:$0xf]
    %v989 = vld [vmem:[#allocation10 + $0x3c] sm:$0xf]
    %v990 = vld [vmem:[#allocation10 + $0x40] sm:$0xf]
    %v991 = vld [vmem:[#allocation10 + $0x44] sm:$0xf]
    %v992 = vld [vmem:[#allocation10 + $0x48] sm:$0xf]
    %v993 = vld [vmem:[#allocation10 + $0x4c] sm:$0xf]
    %v994 = vld [vmem:[#allocation10 + $0x50] sm:$0xf]
    %v995 = vld [vmem:[#allocation10 + $0x54] sm:$0xf]
    %v996 = vld [vmem:[#allocation10 + $0x58] sm:$0xf]
    %v997 = vld [vmem:[#allocation10 + $0x5c] sm:$0xf]
    %v998 = vld [vmem:[#allocation10 + $0x60] sm:$0xf]
    %v999 = vld [vmem:[#allocation10 + $0x64] sm:$0xf]
    %v1000 = vld [vmem:[#allocation10 + $0x68] sm:$0xf]
    %v1001 = vld [vmem:[#allocation10 + $0x6c] sm:$0xf]
    %v1002 = vld [vmem:[#allocation10 + $0x70] sm:$0xf]
    %v1003 = vld [vmem:[#allocation10 + $0x74] sm:$0xf]
    %v1004 = vld [vmem:[#allocation10 + $0x78] sm:$0xf]
    %v1005 = vld [vmem:[#allocation10 + $0x7c] sm:$0xf]
    %v1038 = vunpack.c.l.b16 %v974
    %v1039 = vunpack.c.l.b16 %v975
    %v1040 = vunpack.c.l.b16 %v976
    %v1041 = vunpack.c.l.b16 %v977
    %v1042 = vunpack.c.l.b16 %v978
    %v1043 = vunpack.c.l.b16 %v979
    %v1044 = vunpack.c.l.b16 %v980
    %v1045 = vunpack.c.l.b16 %v981
    %v1046 = vunpack.c.l.b16 %v982
    %v1047 = vunpack.c.l.b16 %v983
    %v1048 = vunpack.c.l.b16 %v984
    %v1049 = vunpack.c.l.b16 %v985
    %v1050 = vunpack.c.l.b16 %v986
    %v1051 = vunpack.c.l.b16 %v987
    %v1052 = vunpack.c.l.b16 %v988
    %v1053 = vunpack.c.l.b16 %v989
    %v1054 = vunpack.c.l.b16 %v990
    %v1055 = vunpack.c.l.b16 %v991
    %v1056 = vunpack.c.l.b16 %v992
    %v1057 = vunpack.c.l.b16 %v993
    %v1058 = vunpack.c.l.b16 %v994
    %v1059 = vunpack.c.l.b16 %v995
    %v1060 = vunpack.c.l.b16 %v996
    %v1061 = vunpack.c.l.b16 %v997
    %v1062 = vunpack.c.l.b16 %v998
    %v1063 = vunpack.c.l.b16 %v999
    %v1064 = vunpack.c.l.b16 %v1000
    %v1065 = vunpack.c.l.b16 %v1001
    %v1066 = vunpack.c.l.b16 %v1002
    %v1067 = vunpack.c.l.b16 %v1003
    %v1068 = vunpack.c.l.b16 %v1004
    %v1069 = vunpack.c.l.b16 %v1005
    %v1070 = vpack.c.b16 %v1039, %v1038
    %v1071 = vpack.c.b16 %v1041, %v1040
    %v1072 = vpack.c.b16 %v1043, %v1042
    %v1073 = vpack.c.b16 %v1045, %v1044
    %v1074 = vpack.c.b16 %v1047, %v1046
    %v1075 = vpack.c.b16 %v1049, %v1048
    %v1076 = vpack.c.b16 %v1051, %v1050
    %v1077 = vpack.c.b16 %v1053, %v1052
    %v1078 = vpack.c.b16 %v1055, %v1054
    %v1079 = vpack.c.b16 %v1057, %v1056
    %v1080 = vpack.c.b16 %v1059, %v1058
    %v1081 = vpack.c.b16 %v1061, %v1060
    %v1082 = vpack.c.b16 %v1063, %v1062
    %v1083 = vpack.c.b16 %v1065, %v1064
    %v1084 = vpack.c.b16 %v1067, %v1066
    %v1085 = vpack.c.b16 %v1069, %v1068
    %1102 = vmatprep.subr.bf16.mxu0 0
    %1103 = vmatpush1.bf16.msra.mxu0 %v1077
    %1104 = vmatprep.subr.bf16.mxu0 0
    %1105 = vmatpush1.bf16.msra.mxu0 %v1076
    %1106 = vmatprep.subr.bf16.mxu0 0
    %1107 = vmatpush1.bf16.msra.mxu0 %v1075
    %1108 = vmatprep.subr.bf16.mxu0 0
    %1109 = vmatpush1.bf16.msra.mxu0 %v1074
    %1110 = vmatprep.subr.bf16.mxu0 0
    %1111 = vmatpush1.bf16.msra.mxu0 %v1073
    %1112 = vmatprep.subr.bf16.mxu0 0
    %1113 = vmatpush1.bf16.msra.mxu0 %v1072
    %1114 = vmatprep.subr.bf16.mxu0 0
    %1115 = vmatpush1.bf16.msra.mxu0 %v1071
    %1116 = vmatprep.subr.bf16.mxu0 0
    %1117 = vmatpush1.bf16.msra.mxu0 %v1070
    %1118 = vmatprep.subr.bf16.mxu0 0
    %1119 = vmatpush2.bf16.msra.mxu0 %v1085
    %1120 = vmatprep.subr.bf16.mxu0 0
    %1121 = vmatpush2.bf16.msra.mxu0 %v1084
    %1122 = vmatprep.subr.bf16.mxu0 0
    %1123 = vmatpush2.bf16.msra.mxu0 %v1083
    %1124 = vmatprep.subr.bf16.mxu0 0
    %1125 = vmatpush2.bf16.msra.mxu0 %v1082
    %1126 = vmatprep.subr.bf16.mxu0 0
    %1127 = vmatpush2.bf16.msra.mxu0 %v1081
    %1128 = vmatprep.subr.bf16.mxu0 0
    %1129 = vmatpush2.bf16.msra.mxu0 %v1080
    %1130 = vmatprep.subr.bf16.mxu0 0
    %1131 = vmatpush2.bf16.msra.mxu0 %v1079
    %1132 = vmatprep.subr.bf16.mxu0 0
    %1133 = vmatpush2.bf16.msra.mxu0 %v1078
    %1134 = vmatprep.mubr.bf16.mxu0 %v973
    %1135 = vmatmul.mubr.bf16.gmra.mxu0 %v972
    %v1136 = vpop.f32.mrf.mxu0
    %v1137 = vadd.f32 0.0, %v1136
    %v1138 = vpop.f32.mrf.mxu0
    %v1139 = vpop.f32.mrf.mxu0
    %v1140 = vpop.f32.mrf.mxu0
    %1141 = vdwg.mxu0
    %v1142 = vadd.f32 %v969, %v1137
    %v1143 = vmax.f32 %v1142, 0.0
    %v1144 = vpack.c.bf16 %v1143, %v1143
    %v1145 = vld [vmem:[#allocation12] sm:$0xf]
    %v1146 = vld [vmem:[#allocation12 + $0x4] sm:$0xf]
    %v1147 = vld [vmem:[#allocation12 + $0x8] sm:$0xf]
    %v1148 = vld [vmem:[#allocation12 + $0xc] sm:$0xf]
    %v1149 = vld [vmem:[#allocation12 + $0x10] sm:$0xf]
    %v1150 = vld [vmem:[#allocation12 + $0x14] sm:$0xf]
    %v1151 = vld [vmem:[#allocation12 + $0x18] sm:$0xf]
    %v1152 = vld [vmem:[#allocation12 + $0x1c] sm:$0xf]
    %v1153 = vld [vmem:[#allocation12 + $0x20] sm:$0xf]
    %v1154 = vld [vmem:[#allocation12 + $0x24] sm:$0xf]
    %v1155 = vld [vmem:[#allocation12 + $0x28] sm:$0xf]
    %v1156 = vld [vmem:[#allocation12 + $0x2c] sm:$0xf]
    %v1157 = vld [vmem:[#allocation12 + $0x30] sm:$0xf]
    %v1158 = vld [vmem:[#allocation12 + $0x34] sm:$0xf]
    %v1159 = vld [vmem:[#allocation12 + $0x38] sm:$0xf]
    %v1160 = vld [vmem:[#allocation12 + $0x3c] sm:$0xf]
    %v1161 = vld [vmem:[%s7] sm:$0x1]
    %v1163 = vlaneseq
    %v1164 = vshrl.u32 %v1163, 7
    %v1165 = vsub.s32 0, %v1164
    %v1166 = vrot.slane %v1161, %v1165
    %v1184 = vunpack.c.l.b16 %v1145
    %v1185 = vunpack.c.l.b16 %v1146
    %v1186 = vunpack.c.l.b16 %v1147
    %v1187 = vunpack.c.l.b16 %v1148
    %v1188 = vunpack.c.l.b16 %v1149
    %v1189 = vunpack.c.l.b16 %v1150
    %v1190 = vunpack.c.l.b16 %v1151
    %v1191 = vunpack.c.l.b16 %v1152
    %v1192 = vunpack.c.l.b16 %v1153
    %v1193 = vunpack.c.l.b16 %v1154
    %v1194 = vunpack.c.l.b16 %v1155
    %v1195 = vunpack.c.l.b16 %v1156
    %v1196 = vunpack.c.l.b16 %v1157
    %v1197 = vunpack.c.l.b16 %v1158
    %v1198 = vunpack.c.l.b16 %v1159
    %v1199 = vunpack.c.l.b16 %v1160
    %v1200 = vpack.c.b16 %v1185, %v1184
    %v1201 = vpack.c.b16 %v1187, %v1186
    %v1202 = vpack.c.b16 %v1189, %v1188
    %v1203 = vpack.c.b16 %v1191, %v1190
    %v1204 = vpack.c.b16 %v1193, %v1192
    %v1205 = vpack.c.b16 %v1195, %v1194
    %v1206 = vpack.c.b16 %v1197, %v1196
    %v1207 = vpack.c.b16 %v1199, %v1198
    %1216 = vmatprep.subr.bf16.mxu0 0
    %1217 = vmatpush1.bf16.msra.mxu0 %v1207
    %1218 = vmatprep.subr.bf16.mxu0 0
    %1219 = vmatpush1.bf16.msra.mxu0 %v1206
    %1220 = vmatprep.subr.bf16.mxu0 0
    %1221 = vmatpush1.bf16.msra.mxu0 %v1205
    %1222 = vmatprep.subr.bf16.mxu0 0
    %1223 = vmatpush1.bf16.msra.mxu0 %v1204
    %1224 = vmatprep.subr.bf16.mxu0 0
    %1225 = vmatpush1.bf16.msra.mxu0 %v1203
    %1226 = vmatprep.subr.bf16.mxu0 0
    %1227 = vmatpush1.bf16.msra.mxu0 %v1202
    %1228 = vmatprep.subr.bf16.mxu0 0
    %1229 = vmatpush1.bf16.msra.mxu0 %v1201
    %1230 = vmatprep.subr.bf16.mxu0 0
    %1231 = vmatpush1.bf16.msra.mxu0 %v1200
    %1232 = vmatprep.subr.bf16.mxu0 0
    %1233 = vmatpush2.bf16.msra.mxu0 0
    %1234 = vmatprep.subr.bf16.mxu0 0
    %1235 = vmatpush2.bf16.msra.mxu0 0
    %1236 = vmatprep.subr.bf16.mxu0 0
    %1237 = vmatpush2.bf16.msra.mxu0 0
    %1238 = vmatprep.subr.bf16.mxu0 0
    %1239 = vmatpush2.bf16.msra.mxu0 0
    %1240 = vmatprep.subr.bf16.mxu0 0
    %1241 = vmatpush2.bf16.msra.mxu0 0
    %1242 = vmatprep.subr.bf16.mxu0 0
    %1243 = vmatpush2.bf16.msra.mxu0 0
    %1244 = vmatprep.subr.bf16.mxu0 0
    %1245 = vmatpush2.bf16.msra.mxu0 0
    %1246 = vmatprep.subr.bf16.mxu0 0
    %1247 = vmatpush2.bf16.msra.mxu0 0
    %1248 = vmatprep.mubr.bf16.mxu0 0
    %1249 = vmatmul.mubr.bf16.gmra.mxu0 %v1144
    %v1250 = vpop.f32.mrf.mxu0
    %v1251 = vadd.f32 %v1166, %v1250
    %v1252 = vpop.f32.mrf.mxu0
    %v1253 = vpop.f32.mrf.mxu0
    %v1254 = vpop.f32.mrf.mxu0
    %1255 = vdwg.mxu0
    %v1256 = vmax.f32 %v1251, 0.0
    %v1257 = vpack.c.bf16 %v1256, %v1256
    %v1258 = vld [vmem:[#allocation13] sm:$0xff]
    %v1259 = vld [vmem:[#allocation13 + $0x8] sm:$0xff]
    %v1260 = vld [vmem:[#allocation13 + $0x10] sm:$0xff]
    %v1261 = vld [vmem:[#allocation13 + $0x18] sm:$0xff]
    %v1262 = vld [vmem:[#allocation13 + $0x20] sm:$0xff]
    %v1263 = vld [vmem:[#allocation13 + $0x28] sm:$0xff]
    %v1264 = vld [vmem:[#allocation13 + $0x30] sm:$0xff]
    %v1265 = vld [vmem:[#allocation13 + $0x38] sm:$0xff]
    %v1266 = vld [vmem:[#allocation13 + $0x40] sm:$0xff]
    %v1267 = vld [vmem:[#allocation13 + $0x48] sm:$0xff]
    %v1268 = vld [vmem:[#allocation13 + $0x50] sm:$0xff]
    %v1269 = vld [vmem:[#allocation13 + $0x58] sm:$0xff]
    %v1270 = vld [vmem:[#allocation13 + $0x60] sm:$0xff]
    %v1271 = vld [vmem:[#allocation13 + $0x68] sm:$0xff]
    %v1272 = vld [vmem:[#allocation13 + $0x70] sm:$0xff]
    %v1273 = vld [vmem:[#allocation13 + $0x78] sm:$0xff]
    %v1274 = vld [vmem:[%s9] sm:$0x3]
    %v1276 = vlaneseq
    %v1277 = vshrl.u32 %v1276, 7
    %v1278 = vsub.s32 0, %v1277
    %v1279 = vrot.slane %v1274, %v1278
    %v1280 = vlaneseq
    %v1281 = vshrl.u32 %v1280, 7
    %v1282 = vsub.s32 1, %v1281
    %v1283 = vrot.slane %v1274, %v1282
    %v1302 = vunpack.c.l.b16 %v1258
    %v1303 = vunpack.c.h.b16 %v1258
    %v1304 = vunpack.c.l.b16 %v1259
    %v1305 = vunpack.c.h.b16 %v1259
    %v1306 = vunpack.c.l.b16 %v1260
    %v1307 = vunpack.c.h.b16 %v1260
    %v1308 = vunpack.c.l.b16 %v1261
    %v1309 = vunpack.c.h.b16 %v1261
    %v1310 = vunpack.c.l.b16 %v1262
    %v1311 = vunpack.c.h.b16 %v1262
    %v1312 = vunpack.c.l.b16 %v1263
    %v1313 = vunpack.c.h.b16 %v1263
    %v1314 = vunpack.c.l.b16 %v1264
    %v1315 = vunpack.c.h.b16 %v1264
    %v1316 = vunpack.c.l.b16 %v1265
    %v1317 = vunpack.c.h.b16 %v1265
    %v1318 = vunpack.c.l.b16 %v1266
    %v1319 = vunpack.c.h.b16 %v1266
    %v1320 = vunpack.c.l.b16 %v1267
    %v1321 = vunpack.c.h.b16 %v1267
    %v1322 = vunpack.c.l.b16 %v1268
    %v1323 = vunpack.c.h.b16 %v1268
    %v1324 = vunpack.c.l.b16 %v1269
    %v1325 = vunpack.c.h.b16 %v1269
    %v1326 = vunpack.c.l.b16 %v1270
    %v1327 = vunpack.c.h.b16 %v1270
    %v1328 = vunpack.c.l.b16 %v1271
    %v1329 = vunpack.c.h.b16 %v1271
    %v1330 = vunpack.c.l.b16 %v1272
    %v1331 = vunpack.c.h.b16 %v1272
    %v1332 = vunpack.c.l.b16 %v1273
    %v1333 = vunpack.c.h.b16 %v1273
    %v1334 = vpack.c.b16 %v1304, %v1302
    %v1335 = vpack.c.b16 %v1305, %v1303
    %v1336 = vpack.c.b16 %v1308, %v1306
    %v1337 = vpack.c.b16 %v1309, %v1307
    %v1338 = vpack.c.b16 %v1312, %v1310
    %v1339 = vpack.c.b16 %v1313, %v1311
    %v1340 = vpack.c.b16 %v1316, %v1314
    %v1341 = vpack.c.b16 %v1317, %v1315
    %v1342 = vpack.c.b16 %v1320, %v1318
    %v1343 = vpack.c.b16 %v1321, %v1319
    %v1344 = vpack.c.b16 %v1324, %v1322
    %v1345 = vpack.c.b16 %v1325, %v1323
    %v1346 = vpack.c.b16 %v1328, %v1326
    %v1347 = vpack.c.b16 %v1329, %v1327
    %v1348 = vpack.c.b16 %v1332, %v1330
    %v1349 = vpack.c.b16 %v1333, %v1331
    %1366 = vmatprep.subr.bf16.mxu0 %v1349
    %1367 = vmatpush1.bf16.msra.mxu0 %v1348
    %1368 = vmatprep.subr.bf16.mxu0 %v1347
    %1369 = vmatpush1.bf16.msra.mxu0 %v1346
    %1370 = vmatprep.subr.bf16.mxu0 %v1345
    %1371 = vmatpush1.bf16.msra.mxu0 %v1344
    %1372 = vmatprep.subr.bf16.mxu0 %v1343
    %1373 = vmatpush1.bf16.msra.mxu0 %v1342
    %1374 = vmatprep.subr.bf16.mxu0 %v1341
    %1375 = vmatpush1.bf16.msra.mxu0 %v1340
    %1376 = vmatprep.subr.bf16.mxu0 %v1339
    %1377 = vmatpush1.bf16.msra.mxu0 %v1338
    %1378 = vmatprep.subr.bf16.mxu0 %v1337
    %1379 = vmatpush1.bf16.msra.mxu0 %v1336
    %1380 = vmatprep.subr.bf16.mxu0 %v1335
    %1381 = vmatpush1.bf16.msra.mxu0 %v1334
    %1382 = vmatprep.subr.bf16.mxu0 0
    %1383 = vmatpush2.bf16.msra.mxu0 0
    %1384 = vmatprep.subr.bf16.mxu0 0
    %1385 = vmatpush2.bf16.msra.mxu0 0
    %1386 = vmatprep.subr.bf16.mxu0 0
    %1387 = vmatpush2.bf16.msra.mxu0 0
    %1388 = vmatprep.subr.bf16.mxu0 0
    %1389 = vmatpush2.bf16.msra.mxu0 0
    %1390 = vmatprep.subr.bf16.mxu0 0
    %1391 = vmatpush2.bf16.msra.mxu0 0
    %1392 = vmatprep.subr.bf16.mxu0 0
    %1393 = vmatpush2.bf16.msra.mxu0 0
    %1394 = vmatprep.subr.bf16.mxu0 0
    %1395 = vmatpush2.bf16.msra.mxu0 0
    %1396 = vmatprep.subr.bf16.mxu0 0
    %1397 = vmatpush2.bf16.msra.mxu0 0
    %1398 = vmatprep.mubr.bf16.mxu0 0
    %1399 = vmatmul.mubr.bf16.gmra.mxu0 %v1257
    %v1400 = vpop.f32.mrf.mxu0
    %v1401 = vadd.f32 %v1279, %v1400
    %v1402 = vpop.f32.mrf.mxu0
    %v1403 = vadd.f32 %v1283, %v1402
    %v1404 = vpop.f32.mrf.mxu0
    %v1405 = vpop.f32.mrf.mxu0
    %1406 = vdwg.mxu0
    %v1407 = vadd.f32 %v970, %v1401
    %v1408 = vadd.f32 %v971, %v1403
    %1409 = vst [vmem:[#allocation2] sm:$0xff] %v1407
    %1410 = vst [vmem:[#allocation2 + $0x8] sm:$0xff] %v1408
    %v1411 = vld [vmem:[#allocation2] sm:$0xff]
    %v1412 = vld [vmem:[#allocation2 + $0x8] sm:$0xff]
    %1413 = vst [vmem:[#allocation15] sm:$0xff] %v1411
    %1414 = vst [vmem:[#allocation15 + $0x8] sm:$0xff] %v1412
    // Predicated region
    $region66: #{tpu_custom_call.1} parent=1 // pred_check
      _
    $region67: #{tpu_custom_call.1} parent=1 // pred_check_branch
      %1416 = sbr.rel (0) target = $region69
    $region68: #{tpu_custom_call.1} parent=1 // pred_region
      %s1418 = ssub.s32 256, 256
      %1419 = vsyncadd [#allocation6], %s1418
      %s1421 = sshll.u32 [#allocation15], 4
      %s1422 = int_to_ptr.vmem [resolvable:$true] %s1421
      %1424 = dma.vmem_to_hbm [thread:$0]  %s1422, 256, %s10, [#allocation6]
    $region69: #{tpu_custom_call.1} parent=1 // pred_fallthru
      _
    // Predicated region
    $region70: #{tpu_custom_call.1} parent=1 // pred_check
      _
    $region71: #{tpu_custom_call.1} parent=1 // pred_check_branch
      %1426 = sbr.rel (0) target = $region73
    $region72: #{tpu_custom_call.1} parent=1 // pred_region
      %1427 = dma.done [#allocation6], 256
    $region73: #{tpu_custom_call.1} parent=1 // pred_fallthru
      _
    %1428 = vsyncpa [#allocation5], 1
    %1429 = vsyncpa [#allocation8], 1
    %1430 = vsyncpa [#allocation11], 1
    %1431 = vsyncpa [#allocation14], 1
    %1432 = vsyncpa [#allocation6], 1

</llo_original>
